<compile_context>
chip_gen: v7x
topology: tpu7x:2x2x1
jax: 0.10.0
libtpu: 0.0.40
codegen_flags: <defaults>
</compile_context>

<pallas_src>
import functools

import jax
import jax.numpy as jnp
from jax import lax
from jax.experimental import pallas as pl
from jax.experimental.pallas import tpu as pltpu


def _importance_kernel(x_ref, a1_ref, b1_ref, a2_ref, b2_ref, o_ref, *, n_chunks):
    """Per-block body.

    x_ref : (C, TH, W)    native NCHW tile; (TH, W) are the tiled minors.
    o_ref : (TH, W)       importance-map tile, written in aligned 8-row groups.
    a1_ref: (8*HID, 8*C)  kron(W1_eff, I8)  (normalize + color fold included)
    b1_ref: (8*HID, 1)
    a2_ref: (8, 8*HID)    kron(W2^T, I8)
    b2_ref: (1, 1)
    """
    c = x_ref.shape[0]
    w = x_ref.shape[-1]

    def body(m, carry):
        r0 = pl.multiple_of(m * 8, 8)
        # Aligned sublane-tile slice (C, 8, W); merging the leading channel dim
        # into full 8-row sublane groups is a layout no-op -> (8*C, W).
        x2 = x_ref[:, pl.ds(r0, 8), :].reshape(c * 8, w)
        # Layer 1 on the MXU (pre-net already folded into a1/b1).  The kron
        # block-diagonal structure keeps each of the 8 image rows independent.
        h = jnp.dot(a1_ref[...], x2, preferred_element_type=jnp.float32)  # (8*HID, W)
        h = jnp.maximum(h + b1_ref[...], 0.0)
        # Layer 2 + sigmoid -> one 8-row group of the output plane.
        o8 = jnp.dot(a2_ref[...], h, preferred_element_type=jnp.float32)  # (8, W)
        o_ref[pl.ds(r0, 8), :] = jax.nn.sigmoid(o8 + b2_ref[...]).astype(o_ref.dtype)
        return carry

    lax.fori_loop(0, n_chunks, body, 0, unroll=(n_chunks <= 8))


def _pick_h_tile(n, h, w, block_pixels):
    """Rows per block: ~block_pixels pixels, multiple of 8 (or the full H)."""
    th = max(8, (block_pixels // max(w, 1)) // 8 * 8)
    th = min(th, h)
    # Single-image call: leave >= 2 H-blocks so both v7x TensorCores get work.
    if n == 1 and th >= h and h >= 16:
        th = (h + 1) // 2
    if th % 8 != 0:
        th = (th // 8) * 8 if th >= 8 else h
    return max(th, 1)


@functools.partial(jax.jit, static_argnames=("block_pixels",))
def normalized_color_importance(x_nchw, mean, std, color_mat3,
                                w1, b1, w2, b2, *, block_pixels=65536):
    """x_nchw: [N, C, H, W] float32. Returns importance map [N, 1, H, W]."""
    N, C, H, W = x_nchw.shape
    HID = w1.shape[1]

    # ---- host-side algebraic fold: normalize + color conversion into layer 1.
    #   h = W1^T @ (M_full @ diag(1/std) @ (x - mean)) + b1 = W_eff @ x + b_eff
    inv_std = (1.0 / std).astype(jnp.float32)                       # [C]
    cmat_full = jnp.eye(C, dtype=jnp.float32).at[:3, :3].set(color_mat3)
    cmat_scaled = cmat_full * inv_std[None, :]                      # M_full @ diag(1/std)
    w1_eff = w1.astype(jnp.float32).T @ cmat_scaled                 # [HID, C]
    b1_eff = b1.astype(jnp.float32) - w1_eff @ mean.astype(jnp.float32)  # [HID]

    # ---- kron-by-8 expansion so the kernel contracts over channels directly
    # on (8*C, W) sublane-group views of the native NCHW tiles (no relayout).
    eye8 = jnp.eye(8, dtype=jnp.float32)
    a1 = jnp.kron(w1_eff, eye8)                                     # [8*HID, 8*C]
    b1k = jnp.repeat(b1_eff, 8).reshape(8 * HID, 1)                 # [8*HID, 1]
    a2 = jnp.kron(w2.astype(jnp.float32).T, eye8)                   # [8, 8*HID]
    b2r = b2.astype(jnp.float32).reshape(1, 1)                      # [1, 1]

    x = x_nchw.astype(jnp.float32)

    th = _pick_h_tile(N, H, W, block_pixels)
    n_chunks = -(-th // 8)               # 8-row groups per block (last may pad)
    grid = (N, pl.cdiv(H, th))           # ragged last H-block is masked, no pad

    kernel = functools.partial(_importance_kernel, n_chunks=n_chunks)

    out = pl.pallas_call(
        kernel,
        out_shape=jax.ShapeDtypeStruct((N, 1, H, W), jnp.float32),
        grid=grid,
        in_specs=[
            pl.BlockSpec((pl.Squeezed(), C, th, W),
                         lambda n, hb: (n, 0, hb, 0)),              # x tile (NCHW)
            pl.BlockSpec((8 * HID, 8 * C), lambda n, hb: (0, 0)),   # kron(W1_eff, I8)
            pl.BlockSpec((8 * HID, 1), lambda n, hb: (0, 0)),       # bias 1
            pl.BlockSpec((8, 8 * HID), lambda n, hb: (0, 0)),       # kron(W2^T, I8)
            pl.BlockSpec((1, 1), lambda n, hb: (0, 0)),             # bias 2
        ],
        out_specs=pl.BlockSpec((pl.Squeezed(), pl.Squeezed(), th, W),
                               lambda n, hb: (n, 0, hb, 0)),
        compiler_params=pltpu.CompilerParams(
            dimension_semantics=("parallel", "parallel"),
            # headroom for wide images (hidden temp is (8*HID, W) f32); still
            # well below v7x's 64 MiB physical VMEM.
            vmem_limit_bytes=48 * 1024 * 1024),
    )(x, a1, b1k, a2, b2r)

    return out


def _reference(x_nchw, mean, std, color_mat3, w1, b1, w2, b2):
    """Pure-JAX reference of the same forward pass (unfolded)."""
    N, C, H, W = x_nchw.shape
    xn = (x_nchw - mean.reshape(1, C, 1, 1)) / std.reshape(1, C, 1, 1)
    rgb = jnp.einsum("ij,bjhw->bihw", color_mat3, xn[:, :3])
    xc = jnp.concatenate([rgb, xn[:, 3:]], axis=1)
    xf = jnp.transpose(xc, (0, 2, 3, 1)).reshape(-1, C)
    h = jnp.maximum(xf @ w1 + b1.reshape(1, -1), 0.0)
    o = jax.nn.sigmoid(h @ w2 + b2.reshape(1, -1))
    return jnp.transpose(o.reshape(N, H, W, 1), (0, 3, 1, 2))


if __name__ == "__main__":
    key = jax.random.PRNGKey(0)
    k_x, k_w1, k_b1, k_w2, k_b2 = jax.random.split(key, 5)

    N, C, H, W = 2, 4, 16, 16     # rgba-style input
    HID = 32                      # hidden width of the synthetic importance net

    x = jax.random.uniform(k_x, (N, C, H, W), dtype=jnp.float32)

    # deterministic normalization parameters (dataset-style per-channel stats)
    mean = jnp.array([0.485, 0.456, 0.406, 0.5], dtype=jnp.float32)
    std = jnp.array([0.229, 0.224, 0.225, 0.25], dtype=jnp.float32)

    # RGB -> XYZ color conversion matrix (DvrColorToSpace('xyz'))
    color_mat3 = jnp.array(
        [[0.4124564, 0.3575761, 0.1804375],
         [0.2126729, 0.7151522, 0.0721750],
         [0.0193339, 0.1191920, 0.9503041]], dtype=jnp.float32)

    # synthetic wrapped importance network parameters (two 1x1 convs)
    w1 = jax.random.normal(k_w1, (C, HID), dtype=jnp.float32) * 0.2
    b1 = jax.random.normal(k_b1, (HID,), dtype=jnp.float32) * 0.05
    w2 = jax.random.normal(k_w2, (HID, 1), dtype=jnp.float32) * 0.2
    b2 = jax.random.normal(k_b2, (1,), dtype=jnp.float32) * 0.05

    out = normalized_color_importance(x, mean, std, color_mat3, w1, b1, w2, b2)
    out = jax.block_until_ready(out)

    ref = _reference(x, mean, std, color_mat3, w1, b1, w2, b2)
    assert out.shape == (N, 1, H, W)
    assert jnp.allclose(out, ref, atol=1e-5, rtol=1e-5), "mismatch vs reference"

    print("KERNEL_OK")
</pallas_src>

<mosaic_0001>
module attributes {stable_mosaic.version = 11 : i64} {
  func.func @_importance_kernel(%arg0: i32, %arg1: i32, %arg2: memref<1x4x16x16xf32, #tpu.memory_space<vmem>>, %arg3: memref<256x32xf32, #tpu.memory_space<vmem>>, %arg4: memref<256x1xf32, #tpu.memory_space<vmem>>, %arg5: memref<8x256xf32, #tpu.memory_space<vmem>>, %arg6: memref<1x1xf32, #tpu.memory_space<vmem>>, %arg7: memref<1x1x16x16xf32, #tpu.memory_space<vmem>>) attributes {dimension_semantics = [#tpu.dimension_semantics<parallel>, #tpu.dimension_semantics<parallel>], iteration_bounds = array<i64: 2, 1>, scalar_prefetch = 0 : i64, scratch_operands = 0 : i64, tpu.core_type = #tpu.core_type<tc>, window_params = [{transform_indices = @transform_0, window_bounds = array<i64: 1, 4, 16, 16>}, {pipeline_mode = #tpu.pipeline_mode<synchronous>, transform_indices = @transform_1, window_bounds = array<i64: 256, 32>}, {pipeline_mode = #tpu.pipeline_mode<synchronous>, transform_indices = @transform_2, window_bounds = array<i64: 256, 1>}, {pipeline_mode = #tpu.pipeline_mode<synchronous>, transform_indices = @transform_3, window_bounds = array<i64: 8, 256>}, {pipeline_mode = #tpu.pipeline_mode<synchronous>, transform_indices = @transform_4, window_bounds = array<i64: 1, 1>}, {transform_indices = @transform_5, window_bounds = array<i64: 1, 1, 16, 16>}]} {
    %c0_i32 = arith.constant 0 : i32
    %c8_i32 = arith.constant 8 : i32
    %0 = arith.muli %c0_i32, %c8_i32 : i32
    %1 = tpu.assume_multiple %0, 8 : i32
    %c0 = arith.constant 0 : index
    %c0_0 = arith.constant 0 : index
    %2 = arith.index_cast %1 : i32 to index
    %c0_1 = arith.constant 0 : index
    %3 = vector.load %arg2[%c0, %c0_0, %2, %c0_1] : memref<1x4x16x16xf32, #tpu.memory_space<vmem>>, vector<1x4x8x16xf32>
    %4 = vector.shape_cast %3 : vector<1x4x8x16xf32> to vector<4x8x16xf32>
    %5 = vector.shape_cast %4 : vector<4x8x16xf32> to vector<32x16xf32>
    %c0_2 = arith.constant 0 : index
    %c0_3 = arith.constant 0 : index
    %6 = vector.load %arg3[%c0_2, %c0_3] : memref<256x32xf32, #tpu.memory_space<vmem>>, vector<256x32xf32>
    %cst = arith.constant dense<0.000000e+00> : vector<256x16xf32>
    %7 = tpu.matmul %6, %5, %cst {dimension_numbers = #tpu.dot_dimension_numbers<[1], [0], [0], [1], [0, 0, 1, 1], [], []>} : vector<256x32xf32>, vector<32x16xf32>, vector<256x16xf32> -> vector<256x16xf32>
    %c0_4 = arith.constant 0 : index
    %c0_5 = arith.constant 0 : index
    %8 = vector.load %arg4[%c0_4, %c0_5] : memref<256x1xf32, #tpu.memory_space<vmem>>, vector<256x1xf32>
    %9 = vector.broadcast %8 : vector<256x1xf32> to vector<256x16xf32>
    %10 = arith.addf %7, %9 : vector<256x16xf32>
    %cst_6 = arith.constant 0.000000e+00 : f32
    %11 = vector.broadcast %cst_6 : f32 to vector<256x16xf32>
    %12 = arith.maximumf %10, %11 : vector<256x16xf32>
    %c0_7 = arith.constant 0 : index
    %c0_8 = arith.constant 0 : index
    %13 = vector.load %arg5[%c0_7, %c0_8] : memref<8x256xf32, #tpu.memory_space<vmem>>, vector<8x256xf32>
    %cst_9 = arith.constant dense<0.000000e+00> : vector<8x16xf32>
    %14 = tpu.matmul %13, %12, %cst_9 {dimension_numbers = #tpu.dot_dimension_numbers<[1], [0], [0], [1], [0, 0, 1, 1], [], []>} : vector<8x256xf32>, vector<256x16xf32>, vector<8x16xf32> -> vector<8x16xf32>
    %c0_10 = arith.constant 0 : index
    %c0_11 = arith.constant 0 : index
    %15 = vector.load %arg6[%c0_10, %c0_11] : memref<1x1xf32, #tpu.memory_space<vmem>>, vector<1x1xf32>
    %16 = vector.broadcast %15 : vector<1x1xf32> to vector<8x16xf32>
    %17 = arith.addf %14, %16 : vector<8x16xf32>
    %18 = arith.negf %17 : vector<8x16xf32>
    %19 = math.exp %18 : vector<8x16xf32>
    %cst_12 = arith.constant 1.000000e+00 : f32
    %20 = vector.broadcast %cst_12 : f32 to vector<8x16xf32>
    %21 = arith.addf %20, %19 : vector<8x16xf32>
    %22 = arith.divf %20, %21 : vector<8x16xf32>
    %c0_13 = arith.constant 0 : index
    %c0_14 = arith.constant 0 : index
    %23 = arith.index_cast %1 : i32 to index
    %c0_15 = arith.constant 0 : index
    %24 = vector.load %arg7[%c0_13, %c0_14, %23, %c0_15] : memref<1x1x16x16xf32, #tpu.memory_space<vmem>>, vector<1x1x8x16xf32>
    %25 = vector.shape_cast %24 : vector<1x1x8x16xf32> to vector<8x16xf32>
    %26 = vector.shape_cast %22 : vector<8x16xf32> to vector<1x1x8x16xf32>
    tpu.vector_store %arg7[%c0_13, %c0_14, %23, %c0_15], %26 {strides = array<i32>} : memref<1x1x16x16xf32, #tpu.memory_space<vmem>>, vector<1x1x8x16xf32>,
    %c1_i32 = arith.constant 1 : i32
    %c8_i32_16 = arith.constant 8 : i32
    %27 = arith.muli %c1_i32, %c8_i32_16 : i32
    %28 = tpu.assume_multiple %27, 8 : i32
    %c0_17 = arith.constant 0 : index
    %c0_18 = arith.constant 0 : index
    %29 = arith.index_cast %28 : i32 to index
    %c0_19 = arith.constant 0 : index
    %30 = vector.load %arg2[%c0_17, %c0_18, %29, %c0_19] : memref<1x4x16x16xf32, #tpu.memory_space<vmem>>, vector<1x4x8x16xf32>
    %31 = vector.shape_cast %30 : vector<1x4x8x16xf32> to vector<4x8x16xf32>
    %32 = vector.shape_cast %31 : vector<4x8x16xf32> to vector<32x16xf32>
    %c0_20 = arith.constant 0 : index
    %c0_21 = arith.constant 0 : index
    %33 = vector.load %arg3[%c0_20, %c0_21] : memref<256x32xf32, #tpu.memory_space<vmem>>, vector<256x32xf32>
    %cst_22 = arith.constant dense<0.000000e+00> : vector<256x16xf32>
    %34 = tpu.matmul %33, %32, %cst_22 {dimension_numbers = #tpu.dot_dimension_numbers<[1], [0], [0], [1], [0, 0, 1, 1], [], []>} : vector<256x32xf32>, vector<32x16xf32>, vector<256x16xf32> -> vector<256x16xf32>
    %c0_23 = arith.constant 0 : index
    %c0_24 = arith.constant 0 : index
    %35 = vector.load %arg4[%c0_23, %c0_24] : memref<256x1xf32, #tpu.memory_space<vmem>>, vector<256x1xf32>
    %36 = vector.broadcast %35 : vector<256x1xf32> to vector<256x16xf32>
    %37 = arith.addf %34, %36 : vector<256x16xf32>
    %cst_25 = arith.constant 0.000000e+00 : f32
    %38 = vector.broadcast %cst_25 : f32 to vector<256x16xf32>
    %39 = arith.maximumf %37, %38 : vector<256x16xf32>
    %c0_26 = arith.constant 0 : index
    %c0_27 = arith.constant 0 : index
    %40 = vector.load %arg5[%c0_26, %c0_27] : memref<8x256xf32, #tpu.memory_space<vmem>>, vector<8x256xf32>
    %cst_28 = arith.constant dense<0.000000e+00> : vector<8x16xf32>
    %41 = tpu.matmul %40, %39, %cst_28 {dimension_numbers = #tpu.dot_dimension_numbers<[1], [0], [0], [1], [0, 0, 1, 1], [], []>} : vector<8x256xf32>, vector<256x16xf32>, vector<8x16xf32> -> vector<8x16xf32>
    %c0_29 = arith.constant 0 : index
    %c0_30 = arith.constant 0 : index
    %42 = vector.load %arg6[%c0_29, %c0_30] : memref<1x1xf32, #tpu.memory_space<vmem>>, vector<1x1xf32>
    %43 = vector.broadcast %42 : vector<1x1xf32> to vector<8x16xf32>
    %44 = arith.addf %41, %43 : vector<8x16xf32>
    %45 = arith.negf %44 : vector<8x16xf32>
    %46 = math.exp %45 : vector<8x16xf32>
    %cst_31 = arith.constant 1.000000e+00 : f32
    %47 = vector.broadcast %cst_31 : f32 to vector<8x16xf32>
    %48 = arith.addf %47, %46 : vector<8x16xf32>
    %49 = arith.divf %47, %48 : vector<8x16xf32>
    %c0_32 = arith.constant 0 : index
    %c0_33 = arith.constant 0 : index
    %50 = arith.index_cast %28 : i32 to index
    %c0_34 = arith.constant 0 : index
    %51 = vector.load %arg7[%c0_32, %c0_33, %50, %c0_34] : memref<1x1x16x16xf32, #tpu.memory_space<vmem>>, vector<1x1x8x16xf32>
    %52 = vector.shape_cast %51 : vector<1x1x8x16xf32> to vector<8x16xf32>
    %53 = vector.shape_cast %49 : vector<8x16xf32> to vector<1x1x8x16xf32>
    tpu.vector_store %arg7[%c0_32, %c0_33, %50, %c0_34], %53 {strides = array<i32>} : memref<1x1x16x16xf32, #tpu.memory_space<vmem>>, vector<1x1x8x16xf32>,
    %c2_i32 = arith.constant 2 : i32
    return
  }
  func.func @transform_0(%arg0: i32, %arg1: i32) -> (i32, i32, i32, i32) {
    %c0_i32 = arith.constant 0 : i32
    %c0_i32_0 = arith.constant 0 : i32
    %c0_i32_1 = arith.constant 0 : i32
    return %arg0, %c0_i32, %arg1, %c0_i32_0 : i32, i32, i32, i32
  }
  func.func @transform_1(%arg0: i32, %arg1: i32) -> (i32, i32) {
    %c0_i32 = arith.constant 0 : i32
    %c0_i32_0 = arith.constant 0 : i32
    %c0_i32_1 = arith.constant 0 : i32
    return %c0_i32, %c0_i32_0 : i32, i32
  }
  func.func @transform_2(%arg0: i32, %arg1: i32) -> (i32, i32) {
    %c0_i32 = arith.constant 0 : i32
    %c0_i32_0 = arith.constant 0 : i32
    %c0_i32_1 = arith.constant 0 : i32
    return %c0_i32, %c0_i32_0 : i32, i32
  }
  func.func @transform_3(%arg0: i32, %arg1: i32) -> (i32, i32) {
    %c0_i32 = arith.constant 0 : i32
    %c0_i32_0 = arith.constant 0 : i32
    %c0_i32_1 = arith.constant 0 : i32
    return %c0_i32, %c0_i32_0 : i32, i32
  }
  func.func @transform_4(%arg0: i32, %arg1: i32) -> (i32, i32) {
    %c0_i32 = arith.constant 0 : i32
    %c0_i32_0 = arith.constant 0 : i32
    %c0_i32_1 = arith.constant 0 : i32
    return %c0_i32, %c0_i32_0 : i32, i32
  }
  func.func @transform_5(%arg0: i32, %arg1: i32) -> (i32, i32, i32, i32) {
    %c0_i32 = arith.constant 0 : i32
    %c0_i32_0 = arith.constant 0 : i32
    %c0_i32_1 = arith.constant 0 : i32
    return %arg0, %c0_i32, %arg1, %c0_i32_0 : i32, i32, i32, i32
  }
}

</mosaic_0001>

<llo_original>
// kernel: sub.1
$region0: #{sub.1}
  #allocation0 [shape = 's32[1]{0}', space=sflag, size = 0x4, scoped, tag = 'scoped memory for sub.1']
  %s0 = inlined_call_operand.vmem [shape: f32[32], index: 0, kind: input, shape index: {}]
  %s1 = inlined_call_operand.vmem [shape: f32[32], index: 1, kind: input, shape index: {}]
  %s2 = inlined_call_operand.vmem [shape: f32[32], index: 2, kind: output, shape index: {}]
  %v3 = vld [vmem:[%s0] sm:$0x1]
  %v4 = vld [vmem:[%s1] sm:$0x1]
  %5 = xla_tuple %v3, %v4
  %6 = xla_tuple %5
  %v7 = vsub.f32 %v3, %v4
  %8 = xla_tuple %v7
  %9 = vst [vmem:[%s2] sm:$0x1] %v7

// kernel: normalized_color_importance.1
$region0: #{normalized_color_importance.1}
  #allocation0 [shape = 'u32[]', space=smem, size = 0x4, offset = 0x4, fixed_abs, tag = 'smem constant byte address 0x4 - core index']
  #allocation1 [shape = 'u32[144,128]{1,0:T(1,128)}', space=vmem, size = 0x12000, scoped, tag = 'internal scratch']
  #allocation2 [shape = 'f32[1,1]{1,0:T(1,128)S(1)}', space=vmem, size = 0x200, scoped, tag = 'scoped memory for normalized_color_importance.1']
  %s0 = inlined_call_operand.vmem [shape: f32[2,4,16,16], index: 0, kind: input, shape index: {}]
  %s1 = inlined_call_operand.vmem [shape: f32[256,32], index: 1, kind: input, shape index: {}]
  %s2 = inlined_call_operand.vmem [shape: f32[256,1], index: 2, kind: input, shape index: {}]
  %s3 = inlined_call_operand.vmem [shape: f32[8,256], index: 3, kind: input, shape index: {}]
  %s4 = inlined_call_operand.<no memory space> [shape: f32[1,1], index: 4, kind: input, shape index: {}]
  %s5 = inlined_call_operand.hbm [shape: f32[2,1,16,16], index: 5, kind: output, shape index: {}]
  %s6 = sld [smem:[#allocation0]]
  $region53: #{normalized_color_importance.1} parent=0
    _
  %s8 = ssub.s32 1, %s6
  %s9 = scalar_select 0, %s8, %s6
  %v10 = vstv %s4
  %11 = vst [vmem:[#allocation2] sm:$0x1] %v10
  $region1: #{normalized_color_importance.1} parent=0
    #allocation3 [shape = 'u8[16384]{0}', space=vmem, size = 0x4000, scoped, tag = 'output window, operand 0']
    #allocation4 [shape = 's32[2]{0}', space=sflag, size = 0x8, scoped, tag = 'scoped memory for normalized_color_importance.1']
    %12 = vsyncpa [#allocation4], 0
    %s13 = scalar_lea.sflag [#allocation4], 1
    %14 = vsyncpa %s13, 0
    loop: start=0, step=1, limit=4
    $region2: #{normalized_color_importance.1} parent=1 // loop_pre_header
      _
    $region3: #{normalized_color_importance.1} parent=1 // loop_header
      %s16 = sphi 0, %s20
      %p17 = scmp.ge.s32.totalorder %s16, 4
      %s23 = sphi 0, %s35
      %s24 = sphi 0, %s31
      %s25 = sphi 0, %s23
      %s26 = sphi 0, %s24
      %s27 = sphi 0, %s25
      %s28 = sphi 0, %s26
      %s40 = sphi 0, %s42
      %s43 = sphi 0, %s40
      %s44 = sphi 0, %s43
      %s60 = sphi 0, %s44
      %s64 = sphi 0, %s64
      %s66 = sphi 0, %s64
      %s67 = sphi 0, %s66
      %s81 = sphi 0, %s67
      %s85 = sphi 0, %s85
      %s87 = sphi 0, %s85
      %s88 = sphi 0, %s87
      %s102 = sphi 0, %s88
      %s106 = sphi 0, %s106
      %s108 = sphi 0, %s106
      %s109 = sphi 0, %s108
      %s123 = sphi 0, %s109
      %s127 = sphi 0, %s127
      %s129 = sphi 0, %s127
      %s130 = sphi 0, %s129
      %s144 = sphi 0, %s130
      %s152 = sphi 0, %s154
      %s155 = sphi 0, %s152
      %s156 = sphi 0, %s155
      %s172 = sphi 0, %s156
    $region4: #{normalized_color_importance.1} parent=1 // loop_header_branch
      %19 = sbr.rel (%p17) target = $region8
    $region5: #{normalized_color_importance.1} parent=1 // loop_body
      %s21 = ssub.s32 %s16, 1
      %s22 = ssub.s32 %s16, 2
      %s29 = sadd.s32 1, %s24
      %p30 = scmp.ge.s32.totalorder %s29, 1
      %s31 = scalar_select %p30, 0, %s29
      %s32 = sadd.s32 1, %s23
      %s33 = scalar_select %p30, %s32, %s23
      %p34 = scmp.ge.s32.totalorder %s33, 2
      %s35 = scalar_select %p34, 0, %s33
      %s36 = ssub.s32 %s23, %s35
      %s37 = ssub.s32 %s24, %s31
      %s38 = sor.u32 %s36, %s37
      %p39 = scmp.eq.s32.totalorder %s38, 0
      %s41 = sadd.s32 %s40, 1
      %s42 = scalar_select %p39, %s40, %s41
      %p45 = pneg %p39
      %p46 = scmp.eq.s32.totalorder %s16, 1
      %p47 = por %p45, %p46
      %p48 = scmp.ne.s32.totalorder %s40, %s43
      %p49 = scmp.eq.s32.totalorder %s16, 0
      %p50 = por %p48, %p49
      %p51 = scmp.ne.s32.totalorder %s40, %s43
      %p52 = scmp.eq.s32.totalorder %s21, 1
      %p53 = por %p51, %p52
      %p54 = scmp.ne.s32.totalorder %s43, %s44
      %p55 = scmp.eq.s32.totalorder %s21, 0
      %p56 = por %p54, %p55
      %p57 = scmp.ne.s32.totalorder %s43, %s44
      %p58 = scmp.eq.s32.totalorder %s22, 1
      %p59 = por %p57, %p58
      %p61 = scmp.ne.s32.totalorder %s44, %s60
      %p62 = scmp.eq.s32.totalorder %s22, 0
      %p63 = por %p61, %p62
      %s65 = sadd.s32 %s64, 1
      %p68 = scmp.eq.s32.totalorder %s16, 1
      %p69 = scmp.ne.s32.totalorder %s64, %s66
      %p70 = scmp.eq.s32.totalorder %s16, 0
      %p71 = por %p69, %p70
      %p72 = scmp.ne.s32.totalorder %s64, %s66
      %p73 = scmp.eq.s32.totalorder %s21, 1
      %p74 = por %p72, %p73
      %p75 = scmp.ne.s32.totalorder %s66, %s67
      %p76 = scmp.eq.s32.totalorder %s21, 0
      %p77 = por %p75, %p76
      %p78 = scmp.ne.s32.totalorder %s66, %s67
      %p79 = scmp.eq.s32.totalorder %s22, 1
      %p80 = por %p78, %p79
      %p82 = scmp.ne.s32.totalorder %s67, %s81
      %p83 = scmp.eq.s32.totalorder %s22, 0
      %p84 = por %p82, %p83
      %s86 = sadd.s32 %s85, 1
      %p89 = scmp.eq.s32.totalorder %s16, 1
      %p90 = scmp.ne.s32.totalorder %s85, %s87
      %p91 = scmp.eq.s32.totalorder %s16, 0
      %p92 = por %p90, %p91
      %p93 = scmp.ne.s32.totalorder %s85, %s87
      %p94 = scmp.eq.s32.totalorder %s21, 1
      %p95 = por %p93, %p94
      %p96 = scmp.ne.s32.totalorder %s87, %s88
      %p97 = scmp.eq.s32.totalorder %s21, 0
      %p98 = por %p96, %p97
      %p99 = scmp.ne.s32.totalorder %s87, %s88
      %p100 = scmp.eq.s32.totalorder %s22, 1
      %p101 = por %p99, %p100
      %p103 = scmp.ne.s32.totalorder %s88, %s102
      %p104 = scmp.eq.s32.totalorder %s22, 0
      %p105 = por %p103, %p104
      %s107 = sadd.s32 %s106, 1
      %p110 = scmp.eq.s32.totalorder %s16, 1
      %p111 = scmp.ne.s32.totalorder %s106, %s108
      %p112 = scmp.eq.s32.totalorder %s16, 0
      %p113 = por %p111, %p112
      %p114 = scmp.ne.s32.totalorder %s106, %s108
      %p115 = scmp.eq.s32.totalorder %s21, 1
      %p116 = por %p114, %p115
      %p117 = scmp.ne.s32.totalorder %s108, %s109
      %p118 = scmp.eq.s32.totalorder %s21, 0
      %p119 = por %p117, %p118
      %p120 = scmp.ne.s32.totalorder %s108, %s109
      %p121 = scmp.eq.s32.totalorder %s22, 1
      %p122 = por %p120, %p121
      %p124 = scmp.ne.s32.totalorder %s109, %s123
      %p125 = scmp.eq.s32.totalorder %s22, 0
      %p126 = por %p124, %p125
      %s128 = sadd.s32 %s127, 1
      %p131 = scmp.eq.s32.totalorder %s16, 1
      %p132 = scmp.ne.s32.totalorder %s127, %s129
      %p133 = scmp.eq.s32.totalorder %s16, 0
      %p134 = por %p132, %p133
      %p135 = scmp.ne.s32.totalorder %s127, %s129
      %p136 = scmp.eq.s32.totalorder %s21, 1
      %p137 = por %p135, %p136
      %p138 = scmp.ne.s32.totalorder %s129, %s130
      %p139 = scmp.eq.s32.totalorder %s21, 0
      %p140 = por %p138, %p139
      %p141 = scmp.ne.s32.totalorder %s129, %s130
      %p142 = scmp.eq.s32.totalorder %s22, 1
      %p143 = por %p141, %p142
      %p145 = scmp.ne.s32.totalorder %s130, %s144
      %p146 = scmp.eq.s32.totalorder %s22, 0
      %p147 = por %p145, %p146
      %s148 = ssub.s32 %s23, %s35
      %s149 = ssub.s32 %s24, %s31
      %s150 = sor.u32 %s148, %s149
      %p151 = scmp.eq.s32.totalorder %s150, 0
      %s153 = sadd.s32 %s152, 1
      %s154 = scalar_select %p151, %s152, %s153
      %p157 = pneg %p151
      %p158 = scmp.eq.s32.totalorder %s16, 1
      %p159 = por %p157, %p158
      %p160 = scmp.ne.s32.totalorder %s152, %s155
      %p161 = scmp.eq.s32.totalorder %s16, 0
      %p162 = por %p160, %p161
      %p163 = scmp.ne.s32.totalorder %s152, %s155
      %p164 = scmp.eq.s32.totalorder %s21, 1
      %p165 = por %p163, %p164
      %p166 = scmp.ne.s32.totalorder %s155, %s156
      %p167 = scmp.eq.s32.totalorder %s21, 0
      %p168 = por %p166, %p167
      %p169 = scmp.ne.s32.totalorder %s155, %s156
      %p170 = scmp.eq.s32.totalorder %s22, 1
      %p171 = por %p169, %p170
      %p173 = scmp.ne.s32.totalorder %s156, %s172
      %p174 = scmp.eq.s32.totalorder %s22, 0
      %p175 = por %p173, %p174
      %p176 = scmp.le.s32.totalorder 1, %s16
      %p177 = scmp.lt.s32.totalorder %s16, 3
      %p178 = pnand %p176, %p177
      %p179 = pneg %p178
      // Predicated region
      $region9: #{normalized_color_importance.1} parent=5 // pred_check
        _
      $region10: #{normalized_color_importance.1} parent=5 // pred_check_branch
        %181 = sbr.rel (%p178) target = $region12
      $region11: #{normalized_color_importance.1} parent=5 // pred_region
        %s182 = ssub.s32 %s16, 1
        // Predicated region
        $region13: #{normalized_color_importance.1} parent=11 // pred_check
          %p183 = pneg %p77
        $region14: #{normalized_color_importance.1} parent=11 // pred_check_branch
          %185 = sbr.rel (%p183) target = $region16
        $region15: #{normalized_color_importance.1} parent=11 // pred_region
          _
        $region16: #{normalized_color_importance.1} parent=11 // pred_fallthru
          _
        // Predicated region
        $region17: #{normalized_color_importance.1} parent=11 // pred_check
          %p186 = pneg %p98
        $region18: #{normalized_color_importance.1} parent=11 // pred_check_branch
          %188 = sbr.rel (%p186) target = $region20
        $region19: #{normalized_color_importance.1} parent=11 // pred_region
          _
        $region20: #{normalized_color_importance.1} parent=11 // pred_fallthru
          _
        // Predicated region
        $region21: #{normalized_color_importance.1} parent=11 // pred_check
          %p189 = pneg %p119
        $region22: #{normalized_color_importance.1} parent=11 // pred_check_branch
          %191 = sbr.rel (%p189) target = $region24
        $region23: #{normalized_color_importance.1} parent=11 // pred_region
          _
        $region24: #{normalized_color_importance.1} parent=11 // pred_fallthru
          _
        // Predicated region
        $region25: #{normalized_color_importance.1} parent=11 // pred_check
          %p192 = pneg %p140
        $region26: #{normalized_color_importance.1} parent=11 // pred_check_branch
          %194 = sbr.rel (%p192) target = $region28
        $region27: #{normalized_color_importance.1} parent=11 // pred_region
          _
        $region28: #{normalized_color_importance.1} parent=11 // pred_fallthru
          _
      $region12: #{normalized_color_importance.1} parent=5 // pred_fallthru
        _
      %p195 = scmp.lt.s32.totalorder %s16, 2
      // Predicated region
      $region29: #{normalized_color_importance.1} parent=5 // pred_check
        %p196 = pneg %p195
      $region30: #{normalized_color_importance.1} parent=5 // pred_check_branch
        %198 = sbr.rel (%p196) target = $region32
      $region31: #{normalized_color_importance.1} parent=5 // pred_region
        // Predicated region
        $region33: #{normalized_color_importance.1} parent=31 // pred_check
          %p199 = pneg %p50
        $region34: #{normalized_color_importance.1} parent=31 // pred_check_branch
          %201 = sbr.rel (%p199) target = $region36
        $region35: #{normalized_color_importance.1} parent=31 // pred_region
          %s202 = smul.u32 2, %s24
          %p203 = scmp.lt.s32.totalorder %s23, 1
          %s204 = scalar_select %p203, %s23, 1
          %p205 = scmp.lt.s32.totalorder %s202, 1
          %s206 = scalar_select %p205, %s202, 1
          %s207 = smul.addr %s204, 8
          %s208 = sadd.s32 %s206, %s207
          %s209 = smul.addr %s208, 8
          %s210 = scalar_lea.vmem %s0, %s209
          %s211 = smul.u32 2, %s24
        $region36: #{normalized_color_importance.1} parent=31 // pred_fallthru
          _
      $region32: #{normalized_color_importance.1} parent=5 // pred_fallthru
        _
      %p212 = scmp.le.s32.totalorder 1, %s16
      %p213 = scmp.lt.s32.totalorder %s16, 3
      %p214 = pnand %p212, %p213
      %p215 = pneg %p214
      // Predicated region
      $region37: #{normalized_color_importance.1} parent=5 // pred_check
        _
      $region38: #{normalized_color_importance.1} parent=5 // pred_check_branch
        %217 = sbr.rel (%p214) target = $region40
      $region39: #{normalized_color_importance.1} parent=5 // pred_region
        %s218 = ssub.s32 %s16, 1
        %s219 = smul.u32 2, %s26
        %p220 = scmp.lt.s32.totalorder %s25, 1
        %s221 = scalar_select %p220, %s25, 1
        %p222 = scmp.lt.s32.totalorder %s219, 1
        %s223 = scalar_select %p222, %s219, 1
        %s224 = smul.addr %s221, 8
        %s225 = sadd.s32 %s223, %s224
        %s226 = smul.addr %s225, 8
        %s227 = scalar_lea.vmem %s0, %s226
        %p228 = pneg %p56
        %p229 = pneg %p53
        %p230 = pneg %p77
        %p231 = pneg %p74
        %p232 = pneg %p98
        %p233 = pneg %p95
        %p234 = pneg %p119
        %p235 = pneg %p116
        %p236 = pneg %p140
        %p237 = pneg %p137
        %p238 = pneg %p168
        %p239 = pneg %p165
        %s240 = sand.u32 %s155, 1
        %s241 = scalar_lea.sflag [#allocation4], %s240
        %s242 = sand.u32 %s155, 1
        %s243 = smul.addr %s242, 16
        %s244 = scalar_lea.vmem [#allocation3], %s243
        %s245 = smul.u32 2, %s26
        %p246 = scmp.lt.s32.totalorder %s25, 1
        %s247 = scalar_select %p246, %s25, 1
        %p248 = scmp.lt.s32.totalorder %s245, 1
        %s249 = scalar_select %p248, %s245, 1
        %s250 = smul.addr %s247, 8
        %s251 = sadd.s32 %s249, %s250
        %s252 = smul.addr %s251, 8
        %s253 = scalar_lea.vmem %s0, %s252
        %s254 = smul.u32 2, %s26
        %s255 = smul.u32 2, %s26
        %v256 = vld [vmem:[%s253] sm:$0xff]
        %v257 = vld [vmem:[%s253 + $0x10] sm:$0xff]
        %v258 = vld [vmem:[%s253 + $0x20] sm:$0xff]
        %v259 = vld [vmem:[%s253 + $0x30] sm:$0xff]
        %v260 = vld [vmem:[%s1] sm:$0xff]
        %v261 = vld [vmem:[%s1 + $0x8] sm:$0xff]
        %v262 = vld [vmem:[%s1 + $0x10] sm:$0xff]
        %v263 = vld [vmem:[%s1 + $0x18] sm:$0xff]
        %v264 = vld [vmem:[%s1 + $0x20] sm:$0xff]
        %v265 = vld [vmem:[%s1 + $0x28] sm:$0xff]
        %v266 = vld [vmem:[%s1 + $0x30] sm:$0xff]
        %v267 = vld [vmem:[%s1 + $0x38] sm:$0xff]
        %v268 = vld [vmem:[%s1 + $0x40] sm:$0xff]
        %v269 = vld [vmem:[%s1 + $0x48] sm:$0xff]
        %v270 = vld [vmem:[%s1 + $0x50] sm:$0xff]
        %v271 = vld [vmem:[%s1 + $0x58] sm:$0xff]
        %v272 = vld [vmem:[%s1 + $0x60] sm:$0xff]
        %v273 = vld [vmem:[%s1 + $0x68] sm:$0xff]
        %v274 = vld [vmem:[%s1 + $0x70] sm:$0xff]
        %v275 = vld [vmem:[%s1 + $0x78] sm:$0xff]
        %v276 = vld [vmem:[%s1 + $0x80] sm:$0xff]
        %v277 = vld [vmem:[%s1 + $0x88] sm:$0xff]
        %v278 = vld [vmem:[%s1 + $0x90] sm:$0xff]
        %v279 = vld [vmem:[%s1 + $0x98] sm:$0xff]
        %v280 = vld [vmem:[%s1 + $0xa0] sm:$0xff]
        %v281 = vld [vmem:[%s1 + $0xa8] sm:$0xff]
        %v282 = vld [vmem:[%s1 + $0xb0] sm:$0xff]
        %v283 = vld [vmem:[%s1 + $0xb8] sm:$0xff]
        %v284 = vld [vmem:[%s1 + $0xc0] sm:$0xff]
        %v285 = vld [vmem:[%s1 + $0xc8] sm:$0xff]
        %v286 = vld [vmem:[%s1 + $0xd0] sm:$0xff]
        %v287 = vld [vmem:[%s1 + $0xd8] sm:$0xff]
        %v288 = vld [vmem:[%s1 + $0xe0] sm:$0xff]
        %v289 = vld [vmem:[%s1 + $0xe8] sm:$0xff]
        %v290 = vld [vmem:[%s1 + $0xf0] sm:$0xff]
        %v291 = vld [vmem:[%s1 + $0xf8] sm:$0xff]
        %v292 = vld [vmem:[%s2] sm:$0xff]
        %v293 = vld [vmem:[%s2 + $0x8] sm:$0xff]
        %v294 = vld [vmem:[%s2 + $0x10] sm:$0xff]
        %v295 = vld [vmem:[%s2 + $0x18] sm:$0xff]
        %v296 = vld [vmem:[%s2 + $0x20] sm:$0xff]
        %v297 = vld [vmem:[%s2 + $0x28] sm:$0xff]
        %v298 = vld [vmem:[%s2 + $0x30] sm:$0xff]
        %v299 = vld [vmem:[%s2 + $0x38] sm:$0xff]
        %v300 = vld [vmem:[%s2 + $0x40] sm:$0xff]
        %v301 = vld [vmem:[%s2 + $0x48] sm:$0xff]
        %v302 = vld [vmem:[%s2 + $0x50] sm:$0xff]
        %v303 = vld [vmem:[%s2 + $0x58] sm:$0xff]
        %v304 = vld [vmem:[%s2 + $0x60] sm:$0xff]
        %v305 = vld [vmem:[%s2 + $0x68] sm:$0xff]
        %v306 = vld [vmem:[%s2 + $0x70] sm:$0xff]
        %v307 = vld [vmem:[%s2 + $0x78] sm:$0xff]
        %v308 = vld [vmem:[%s2 + $0x80] sm:$0xff]
        %v309 = vld [vmem:[%s2 + $0x88] sm:$0xff]
        %v310 = vld [vmem:[%s2 + $0x90] sm:$0xff]
        %v311 = vld [vmem:[%s2 + $0x98] sm:$0xff]
        %v312 = vld [vmem:[%s2 + $0xa0] sm:$0xff]
        %v313 = vld [vmem:[%s2 + $0xa8] sm:$0xff]
        %v314 = vld [vmem:[%s2 + $0xb0] sm:$0xff]
        %v315 = vld [vmem:[%s2 + $0xb8] sm:$0xff]
        %v316 = vld [vmem:[%s2 + $0xc0] sm:$0xff]
        %v317 = vld [vmem:[%s2 + $0xc8] sm:$0xff]
        %v318 = vld [vmem:[%s2 + $0xd0] sm:$0xff]
        %v319 = vld [vmem:[%s2 + $0xd8] sm:$0xff]
        %v320 = vld [vmem:[%s2 + $0xe0] sm:$0xff]
        %v321 = vld [vmem:[%s2 + $0xe8] sm:$0xff]
        %v322 = vld [vmem:[%s2 + $0xf0] sm:$0xff]
        %v323 = vld [vmem:[%s2 + $0xf8] sm:$0xff]
        %325 = vset.pattern.permute.xlu0 0
        %326 = vperm.xlu0 %325, %v292
        %v327 = vpop.permute.xlu0 %326
        %330 = vset.pattern.permute.xlu0 0
        %331 = vperm.xlu0 %330, %v293
        %v332 = vpop.permute.xlu0 %331
        %335 = vset.pattern.permute.xlu0 0
        %336 = vperm.xlu0 %335, %v294
        %v337 = vpop.permute.xlu0 %336
        %340 = vset.pattern.permute.xlu0 0
        %341 = vperm.xlu0 %340, %v295
        %v342 = vpop.permute.xlu0 %341
        %345 = vset.pattern.permute.xlu0 0
        %346 = vperm.xlu0 %345, %v296
        %v347 = vpop.permute.xlu0 %346
        %350 = vset.pattern.permute.xlu0 0
        %351 = vperm.xlu0 %350, %v297
        %v352 = vpop.permute.xlu0 %351
        %355 = vset.pattern.permute.xlu0 0
        %356 = vperm.xlu0 %355, %v298
        %v357 = vpop.permute.xlu0 %356
        %360 = vset.pattern.permute.xlu0 0
        %361 = vperm.xlu0 %360, %v299
        %v362 = vpop.permute.xlu0 %361
        %365 = vset.pattern.permute.xlu0 0
        %366 = vperm.xlu0 %365, %v300
        %v367 = vpop.permute.xlu0 %366
        %370 = vset.pattern.permute.xlu0 0
        %371 = vperm.xlu0 %370, %v301
        %v372 = vpop.permute.xlu0 %371
        %375 = vset.pattern.permute.xlu0 0
        %376 = vperm.xlu0 %375, %v302
        %v377 = vpop.permute.xlu0 %376
        %380 = vset.pattern.permute.xlu0 0
        %381 = vperm.xlu0 %380, %v303
        %v382 = vpop.permute.xlu0 %381
        %385 = vset.pattern.permute.xlu0 0
        %386 = vperm.xlu0 %385, %v304
        %v387 = vpop.permute.xlu0 %386
        %390 = vset.pattern.permute.xlu0 0
        %391 = vperm.xlu0 %390, %v305
        %v392 = vpop.permute.xlu0 %391
        %395 = vset.pattern.permute.xlu0 0
        %396 = vperm.xlu0 %395, %v306
        %v397 = vpop.permute.xlu0 %396
        %400 = vset.pattern.permute.xlu0 0
        %401 = vperm.xlu0 %400, %v307
        %v402 = vpop.permute.xlu0 %401
        %405 = vset.pattern.permute.xlu0 0
        %406 = vperm.xlu0 %405, %v308
        %v407 = vpop.permute.xlu0 %406
        %410 = vset.pattern.permute.xlu0 0
        %411 = vperm.xlu0 %410, %v309
        %v412 = vpop.permute.xlu0 %411
        %415 = vset.pattern.permute.xlu0 0
        %416 = vperm.xlu0 %415, %v310
        %v417 = vpop.permute.xlu0 %416
        %420 = vset.pattern.permute.xlu0 0
        %421 = vperm.xlu0 %420, %v311
        %v422 = vpop.permute.xlu0 %421
        %425 = vset.pattern.permute.xlu0 0
        %426 = vperm.xlu0 %425, %v312
        %v427 = vpop.permute.xlu0 %426
        %430 = vset.pattern.permute.xlu0 0
        %431 = vperm.xlu0 %430, %v313
        %v432 = vpop.permute.xlu0 %431
        %435 = vset.pattern.permute.xlu0 0
        %436 = vperm.xlu0 %435, %v314
        %v437 = vpop.permute.xlu0 %436
        %440 = vset.pattern.permute.xlu0 0
        %441 = vperm.xlu0 %440, %v315
        %v442 = vpop.permute.xlu0 %441
        %445 = vset.pattern.permute.xlu0 0
        %446 = vperm.xlu0 %445, %v316
        %v447 = vpop.permute.xlu0 %446
        %450 = vset.pattern.permute.xlu0 0
        %451 = vperm.xlu0 %450, %v317
        %v452 = vpop.permute.xlu0 %451
        %455 = vset.pattern.permute.xlu0 0
        %456 = vperm.xlu0 %455, %v318
        %v457 = vpop.permute.xlu0 %456
        %460 = vset.pattern.permute.xlu0 0
        %461 = vperm.xlu0 %460, %v319
        %v462 = vpop.permute.xlu0 %461
        %465 = vset.pattern.permute.xlu0 0
        %466 = vperm.xlu0 %465, %v320
        %v467 = vpop.permute.xlu0 %466
        %470 = vset.pattern.permute.xlu0 0
        %471 = vperm.xlu0 %470, %v321
        %v472 = vpop.permute.xlu0 %471
        %475 = vset.pattern.permute.xlu0 0
        %476 = vperm.xlu0 %475, %v322
        %v477 = vpop.permute.xlu0 %476
        %480 = vset.pattern.permute.xlu0 0
        %481 = vperm.xlu0 %480, %v323
        %v482 = vpop.permute.xlu0 %481
        %vm484 = vcmask 261120
        %v486 = vsel %vm484, %v260, 0
        %v489 = vsel %vm484, %v261, 0
        %v492 = vsel %vm484, %v262, 0
        %v495 = vsel %vm484, %v263, 0
        %v498 = vsel %vm484, %v264, 0
        %v501 = vsel %vm484, %v265, 0
        %v504 = vsel %vm484, %v266, 0
        %v507 = vsel %vm484, %v267, 0
        %v510 = vsel %vm484, %v268, 0
        %v513 = vsel %vm484, %v269, 0
        %v516 = vsel %vm484, %v270, 0
        %v519 = vsel %vm484, %v271, 0
        %v522 = vsel %vm484, %v272, 0
        %v525 = vsel %vm484, %v273, 0
        %v528 = vsel %vm484, %v274, 0
        %v531 = vsel %vm484, %v275, 0
        %v534 = vsel %vm484, %v276, 0
        %v537 = vsel %vm484, %v277, 0
        %v540 = vsel %vm484, %v278, 0
        %v543 = vsel %vm484, %v279, 0
        %v546 = vsel %vm484, %v280, 0
        %v549 = vsel %vm484, %v281, 0
        %v552 = vsel %vm484, %v282, 0
        %v555 = vsel %vm484, %v283, 0
        %v558 = vsel %vm484, %v284, 0
        %v561 = vsel %vm484, %v285, 0
        %v564 = vsel %vm484, %v286, 0
        %v567 = vsel %vm484, %v287, 0
        %v570 = vsel %vm484, %v288, 0
        %v573 = vsel %vm484, %v289, 0
        %v576 = vsel %vm484, %v290, 0
        %v579 = vsel %vm484, %v291, 0
        %581 = vmatprep.subr.mxu0 0.0
        %582 = vmatpush1.msra.mxu0 %v256
        %583 = vmatprep.subr.mxu0 0.0
        %584 = vmatpush1.msra.mxu0 %v257
        %585 = vmatprep.subr.mxu0 0.0
        %586 = vmatpush1.msra.mxu0 %v258
        %587 = vmatprep.subr.mxu0 0.0
        %588 = vmatpush1.msra.mxu0 %v259
        %589 = vmatprep.subr.mxu0 0.0
        %590 = vmatpush1.msra.mxu0 0.0
        %591 = vmatprep.subr.mxu0 0.0
        %592 = vmatpush1.msra.mxu0 0.0
        %593 = vmatprep.subr.mxu0 0.0
        %594 = vmatpush1.msra.mxu0 0.0
        %595 = vmatprep.subr.mxu0 0.0
        %596 = vmatpush1.msra.mxu0 0.0
        %597 = vmatprep.subr.mxu0 0.0
        %598 = vmatpush1.msra.mxu0 0.0
        %599 = vmatprep.subr.mxu0 0.0
        %600 = vmatpush1.msra.mxu0 0.0
        %601 = vmatprep.subr.mxu0 0.0
        %602 = vmatpush1.msra.mxu0 0.0
        %603 = vmatprep.subr.mxu0 0.0
        %604 = vmatpush1.msra.mxu0 0.0
        %605 = vmatprep.subr.mxu0 0.0
        %606 = vmatpush1.msra.mxu0 0.0
        %607 = vmatprep.subr.mxu0 0.0
        %608 = vmatpush1.msra.mxu0 0.0
        %609 = vmatprep.subr.mxu0 0.0
        %610 = vmatpush1.msra.mxu0 0.0
        %611 = vmatprep.subr.mxu0 0.0
        %612 = vmatpush1.msra.mxu0 0.0
        %613 = vmatprep.subr.mxu0 0.0
        %614 = vmatpush1.msra.mxu0 0.0
        %615 = vmatprep.subr.mxu0 0.0
        %616 = vmatpush1.msra.mxu0 0.0
        %617 = vmatprep.subr.mxu0 0.0
        %618 = vmatpush1.msra.mxu0 0.0
        %619 = vmatprep.subr.mxu0 0.0
        %620 = vmatpush1.msra.mxu0 0.0
        %621 = vmatprep.subr.mxu0 0.0
        %622 = vmatpush1.msra.mxu0 0.0
        %623 = vmatprep.subr.mxu0 0.0
        %624 = vmatpush1.msra.mxu0 0.0
        %625 = vmatprep.subr.mxu0 0.0
        %626 = vmatpush1.msra.mxu0 0.0
        %627 = vmatprep.subr.mxu0 0.0
        %628 = vmatpush1.msra.mxu0 0.0
        %629 = vmatprep.subr.mxu0 0.0
        %630 = vmatpush1.msra.mxu0 0.0
        %631 = vmatprep.subr.mxu0 0.0
        %632 = vmatpush1.msra.mxu0 0.0
        %633 = vmatprep.subr.mxu0 0.0
        %634 = vmatpush1.msra.mxu0 0.0
        %635 = vmatprep.subr.mxu0 0.0
        %636 = vmatpush1.msra.mxu0 0.0
        %637 = vmatprep.subr.mxu0 0.0
        %638 = vmatpush1.msra.mxu0 0.0
        %639 = vmatprep.subr.mxu0 0.0
        %640 = vmatpush1.msra.mxu0 0.0
        %641 = vmatprep.subr.mxu0 0.0
        %642 = vmatpush1.msra.mxu0 0.0
        %643 = vmatprep.subr.mxu0 0.0
        %644 = vmatpush1.msra.mxu0 0.0
        %645 = vmatprep.mubr.f32.mxu0 0.0
        %646 = vmatmul.mubr.f32.gmra.mrb[0].mxu0 %v486
        %v647 = vpop.f32.mrb[0].mxu0
        %v648 = vadd.f32 %v327, %v647
        %v649 = vpop.f32.mrb[0].mxu0
        %650 = vmatprep.mubr.f32.mxu0 0.0
        %651 = vmatmul.mubr.f32.gmra.mrb[0].mxu0 %v489
        %v652 = vpop.f32.mrb[0].mxu0
        %v653 = vadd.f32 %v332, %v652
        %v654 = vpop.f32.mrb[0].mxu0
        %655 = vmatprep.mubr.f32.mxu0 0.0
        %656 = vmatmul.mubr.f32.gmra.mrb[0].mxu0 %v492
        %v657 = vpop.f32.mrb[0].mxu0
        %v658 = vadd.f32 %v337, %v657
        %v659 = vpop.f32.mrb[0].mxu0
        %660 = vmatprep.mubr.f32.mxu0 0.0
        %661 = vmatmul.mubr.f32.gmra.mrb[0].mxu0 %v495
        %v662 = vpop.f32.mrb[0].mxu0
        %v663 = vadd.f32 %v342, %v662
        %v664 = vpop.f32.mrb[0].mxu0
        %665 = vmatprep.mubr.f32.mxu0 0.0
        %666 = vmatmul.mubr.f32.gmra.mrb[0].mxu0 %v498
        %v667 = vpop.f32.mrb[0].mxu0
        %v668 = vadd.f32 %v347, %v667
        %v669 = vpop.f32.mrb[0].mxu0
        %670 = vmatprep.mubr.f32.mxu0 0.0
        %671 = vmatmul.mubr.f32.gmra.mrb[0].mxu0 %v501
        %v672 = vpop.f32.mrb[0].mxu0
        %v673 = vadd.f32 %v352, %v672
        %v674 = vpop.f32.mrb[0].mxu0
        %675 = vmatprep.mubr.f32.mxu0 0.0
        %676 = vmatmul.mubr.f32.gmra.mrb[0].mxu0 %v504
        %v677 = vpop.f32.mrb[0].mxu0
        %v678 = vadd.f32 %v357, %v677
        %v679 = vpop.f32.mrb[0].mxu0
        %680 = vmatprep.mubr.f32.mxu0 0.0
        %681 = vmatmul.mubr.f32.gmra.mrb[0].mxu0 %v507
        %v682 = vpop.f32.mrb[0].mxu0
        %v683 = vadd.f32 %v362, %v682
        %v684 = vpop.f32.mrb[0].mxu0
        %685 = vmatprep.mubr.f32.mxu0 0.0
        %686 = vmatmul.mubr.f32.gmra.mrb[0].mxu0 %v510
        %v687 = vpop.f32.mrb[0].mxu0
        %v688 = vadd.f32 %v367, %v687
        %v689 = vpop.f32.mrb[0].mxu0
        %690 = vmatprep.mubr.f32.mxu0 0.0
        %691 = vmatmul.mubr.f32.gmra.mrb[0].mxu0 %v513
        %v692 = vpop.f32.mrb[0].mxu0
        %v693 = vadd.f32 %v372, %v692
        %v694 = vpop.f32.mrb[0].mxu0
        %695 = vmatprep.mubr.f32.mxu0 0.0
        %696 = vmatmul.mubr.f32.gmra.mrb[0].mxu0 %v516
        %v697 = vpop.f32.mrb[0].mxu0
        %v698 = vadd.f32 %v377, %v697
        %v699 = vpop.f32.mrb[0].mxu0
        %700 = vmatprep.mubr.f32.mxu0 0.0
        %701 = vmatmul.mubr.f32.gmra.mrb[0].mxu0 %v519
        %v702 = vpop.f32.mrb[0].mxu0
        %v703 = vadd.f32 %v382, %v702
        %v704 = vpop.f32.mrb[0].mxu0
        %705 = vmatprep.mubr.f32.mxu0 0.0
        %706 = vmatmul.mubr.f32.gmra.mrb[0].mxu0 %v522
        %v707 = vpop.f32.mrb[0].mxu0
        %v708 = vadd.f32 %v387, %v707
        %v709 = vpop.f32.mrb[0].mxu0
        %710 = vmatprep.mubr.f32.mxu0 0.0
        %711 = vmatmul.mubr.f32.gmra.mrb[0].mxu0 %v525
        %v712 = vpop.f32.mrb[0].mxu0
        %v713 = vadd.f32 %v392, %v712
        %v714 = vpop.f32.mrb[0].mxu0
        %715 = vmatprep.mubr.f32.mxu0 0.0
        %716 = vmatmul.mubr.f32.gmra.mrb[0].mxu0 %v528
        %v717 = vpop.f32.mrb[0].mxu0
        %v718 = vadd.f32 %v397, %v717
        %v719 = vpop.f32.mrb[0].mxu0
        %720 = vmatprep.mubr.f32.mxu0 0.0
        %721 = vmatmul.mubr.f32.gmra.mrb[0].mxu0 %v531
        %v722 = vpop.f32.mrb[0].mxu0
        %v723 = vadd.f32 %v402, %v722
        %v724 = vpop.f32.mrb[0].mxu0
        %725 = vmatprep.mubr.f32.mxu0 0.0
        %726 = vmatmul.mubr.f32.gmra.mrb[0].mxu0 %v534
        %v727 = vpop.f32.mrb[0].mxu0
        %v728 = vadd.f32 %v407, %v727
        %v729 = vpop.f32.mrb[0].mxu0
        %730 = vmatprep.mubr.f32.mxu0 0.0
        %731 = vmatmul.mubr.f32.gmra.mrb[0].mxu0 %v537
        %v732 = vpop.f32.mrb[0].mxu0
        %v733 = vadd.f32 %v412, %v732
        %v734 = vpop.f32.mrb[0].mxu0
        %735 = vmatprep.mubr.f32.mxu0 0.0
        %736 = vmatmul.mubr.f32.gmra.mrb[0].mxu0 %v540
        %v737 = vpop.f32.mrb[0].mxu0
        %v738 = vadd.f32 %v417, %v737
        %v739 = vpop.f32.mrb[0].mxu0
        %740 = vmatprep.mubr.f32.mxu0 0.0
        %741 = vmatmul.mubr.f32.gmra.mrb[0].mxu0 %v543
        %v742 = vpop.f32.mrb[0].mxu0
        %v743 = vadd.f32 %v422, %v742
        %v744 = vpop.f32.mrb[0].mxu0
        %745 = vmatprep.mubr.f32.mxu0 0.0
        %746 = vmatmul.mubr.f32.gmra.mrb[0].mxu0 %v546
        %v747 = vpop.f32.mrb[0].mxu0
        %v748 = vadd.f32 %v427, %v747
        %v749 = vpop.f32.mrb[0].mxu0
        %750 = vmatprep.mubr.f32.mxu0 0.0
        %751 = vmatmul.mubr.f32.gmra.mrb[0].mxu0 %v549
        %v752 = vpop.f32.mrb[0].mxu0
        %v753 = vadd.f32 %v432, %v752
        %v754 = vpop.f32.mrb[0].mxu0
        %755 = vmatprep.mubr.f32.mxu0 0.0
        %756 = vmatmul.mubr.f32.gmra.mrb[0].mxu0 %v552
        %v757 = vpop.f32.mrb[0].mxu0
        %v758 = vadd.f32 %v437, %v757
        %v759 = vpop.f32.mrb[0].mxu0
        %760 = vmatprep.mubr.f32.mxu0 0.0
        %761 = vmatmul.mubr.f32.gmra.mrb[0].mxu0 %v555
        %v762 = vpop.f32.mrb[0].mxu0
        %v763 = vadd.f32 %v442, %v762
        %v764 = vpop.f32.mrb[0].mxu0
        %765 = vmatprep.mubr.f32.mxu0 0.0
        %766 = vmatmul.mubr.f32.gmra.mrb[0].mxu0 %v558
        %v767 = vpop.f32.mrb[0].mxu0
        %v768 = vadd.f32 %v447, %v767
        %v769 = vpop.f32.mrb[0].mxu0
        %770 = vmatprep.mubr.f32.mxu0 0.0
        %771 = vmatmul.mubr.f32.gmra.mrb[0].mxu0 %v561
        %v772 = vpop.f32.mrb[0].mxu0
        %v773 = vadd.f32 %v452, %v772
        %v774 = vpop.f32.mrb[0].mxu0
        %775 = vmatprep.mubr.f32.mxu0 0.0
        %776 = vmatmul.mubr.f32.gmra.mrb[0].mxu0 %v564
        %v777 = vpop.f32.mrb[0].mxu0
        %v778 = vadd.f32 %v457, %v777
        %v779 = vpop.f32.mrb[0].mxu0
        %780 = vmatprep.mubr.f32.mxu0 0.0
        %781 = vmatmul.mubr.f32.gmra.mrb[0].mxu0 %v567
        %v782 = vpop.f32.mrb[0].mxu0
        %v783 = vadd.f32 %v462, %v782
        %v784 = vpop.f32.mrb[0].mxu0
        %785 = vmatprep.mubr.f32.mxu0 0.0
        %786 = vmatmul.mubr.f32.gmra.mrb[0].mxu0 %v570
        %v787 = vpop.f32.mrb[0].mxu0
        %v788 = vadd.f32 %v467, %v787
        %v789 = vpop.f32.mrb[0].mxu0
        %790 = vmatprep.mubr.f32.mxu0 0.0
        %791 = vmatmul.mubr.f32.gmra.mrb[0].mxu0 %v573
        %v792 = vpop.f32.mrb[0].mxu0
        %v793 = vadd.f32 %v472, %v792
        %v794 = vpop.f32.mrb[0].mxu0
        %795 = vmatprep.mubr.f32.mxu0 0.0
        %796 = vmatmul.mubr.f32.gmra.mrb[0].mxu0 %v576
        %v797 = vpop.f32.mrb[0].mxu0
        %v798 = vadd.f32 %v477, %v797
        %v799 = vpop.f32.mrb[0].mxu0
        %800 = vmatprep.mubr.f32.mxu0 0.0
        %801 = vmatmul.mubr.f32.gmra.mrb[0].mxu0 %v579
        %v802 = vpop.f32.mrb[0].mxu0
        %v803 = vadd.f32 %v482, %v802
        %v804 = vpop.f32.mrb[0].mxu0
        %805 = vdwg.mxu0
        %v806 = vmax.f32 %v648, 0.0
        %v807 = vmax.f32 %v653, 0.0
        %v808 = vmax.f32 %v658, 0.0
        %v809 = vmax.f32 %v663, 0.0
        %v810 = vmax.f32 %v668, 0.0
        %v811 = vmax.f32 %v673, 0.0
        %v812 = vmax.f32 %v678, 0.0
        %v813 = vmax.f32 %v683, 0.0
        %v814 = vmax.f32 %v688, 0.0
        %v815 = vmax.f32 %v693, 0.0
        %v816 = vmax.f32 %v698, 0.0
        %v817 = vmax.f32 %v703, 0.0
        %v818 = vmax.f32 %v708, 0.0
        %v819 = vmax.f32 %v713, 0.0
        %v820 = vmax.f32 %v718, 0.0
        %v821 = vmax.f32 %v723, 0.0
        %v822 = vmax.f32 %v728, 0.0
        %v823 = vmax.f32 %v733, 0.0
        %v824 = vmax.f32 %v738, 0.0
        %v825 = vmax.f32 %v743, 0.0
        %v826 = vmax.f32 %v748, 0.0
        %v827 = vmax.f32 %v753, 0.0
        %v828 = vmax.f32 %v758, 0.0
        %v829 = vmax.f32 %v763, 0.0
        %v830 = vmax.f32 %v768, 0.0
        %v831 = vmax.f32 %v773, 0.0
        %v832 = vmax.f32 %v778, 0.0
        %v833 = vmax.f32 %v783, 0.0
        %v834 = vmax.f32 %v788, 0.0
        %v835 = vmax.f32 %v793, 0.0
        %v836 = vmax.f32 %v798, 0.0
        %v837 = vmax.f32 %v803, 0.0
        %v838 = vld [vmem:[%s3] sm:$0xff]
        %v839 = vld [vmem:[%s3 + $0x8] sm:$0xff]
        %v840 = vld [vmem:[#allocation2] sm:$0x1]
        %v842 = vlaneseq
        %v843 = vshrl.u32 %v842, 7
        %v844 = vsub.s32 0, %v843
        %v845 = vrot.slane %v840, %v844
        %846 = vset.pattern.permute.xlu0 0
        %847 = vperm.xlu0 %846, %v845
        %v848 = vpop.permute.xlu0 %847
        %850 = vmatprep.subr.mxu0 0.0
        %851 = vmatpush1.msra.mxu0 %v806
        %852 = vmatprep.subr.mxu0 0.0
        %853 = vmatpush1.msra.mxu0 %v807
        %854 = vmatprep.subr.mxu0 0.0
        %855 = vmatpush1.msra.mxu0 %v808
        %856 = vmatprep.subr.mxu0 0.0
        %857 = vmatpush1.msra.mxu0 %v809
        %858 = vmatprep.subr.mxu0 0.0
        %859 = vmatpush1.msra.mxu0 %v810
        %860 = vmatprep.subr.mxu0 0.0
        %861 = vmatpush1.msra.mxu0 %v811
        %862 = vmatprep.subr.mxu0 0.0
        %863 = vmatpush1.msra.mxu0 %v812
        %864 = vmatprep.subr.mxu0 0.0
        %865 = vmatpush1.msra.mxu0 %v813
        %866 = vmatprep.subr.mxu0 0.0
        %867 = vmatpush1.msra.mxu0 %v814
        %868 = vmatprep.subr.mxu0 0.0
        %869 = vmatpush1.msra.mxu0 %v815
        %870 = vmatprep.subr.mxu0 0.0
        %871 = vmatpush1.msra.mxu0 %v816
        %872 = vmatprep.subr.mxu0 0.0
        %873 = vmatpush1.msra.mxu0 %v817
        %874 = vmatprep.subr.mxu0 0.0
        %875 = vmatpush1.msra.mxu0 %v818
        %876 = vmatprep.subr.mxu0 0.0
        %877 = vmatpush1.msra.mxu0 %v819
        %878 = vmatprep.subr.mxu0 0.0
        %879 = vmatpush1.msra.mxu0 %v820
        %880 = vmatprep.subr.mxu0 0.0
        %881 = vmatpush1.msra.mxu0 %v821
        %882 = vmatprep.subr.mxu0 0.0
        %883 = vmatpush1.msra.mxu0 %v822
        %884 = vmatprep.subr.mxu0 0.0
        %885 = vmatpush1.msra.mxu0 %v823
        %886 = vmatprep.subr.mxu0 0.0
        %887 = vmatpush1.msra.mxu0 %v824
        %888 = vmatprep.subr.mxu0 0.0
        %889 = vmatpush1.msra.mxu0 %v825
        %890 = vmatprep.subr.mxu0 0.0
        %891 = vmatpush1.msra.mxu0 %v826
        %892 = vmatprep.subr.mxu0 0.0
        %893 = vmatpush1.msra.mxu0 %v827
        %894 = vmatprep.subr.mxu0 0.0
        %895 = vmatpush1.msra.mxu0 %v828
        %896 = vmatprep.subr.mxu0 0.0
        %897 = vmatpush1.msra.mxu0 %v829
        %898 = vmatprep.subr.mxu0 0.0
        %899 = vmatpush1.msra.mxu0 %v830
        %900 = vmatprep.subr.mxu0 0.0
        %901 = vmatpush1.msra.mxu0 %v831
        %902 = vmatprep.subr.mxu0 0.0
        %903 = vmatpush1.msra.mxu0 %v832
        %904 = vmatprep.subr.mxu0 0.0
        %905 = vmatpush1.msra.mxu0 %v833
        %906 = vmatprep.subr.mxu0 0.0
        %907 = vmatpush1.msra.mxu0 %v834
        %908 = vmatprep.subr.mxu0 0.0
        %909 = vmatpush1.msra.mxu0 %v835
        %910 = vmatprep.subr.mxu0 0.0
        %911 = vmatpush1.msra.mxu0 %v836
        %912 = vmatprep.subr.mxu0 0.0
        %913 = vmatpush1.msra.mxu0 %v837
        %914 = vmatprep.mubr.f32.mxu0 %v839
        %915 = vmatmul.mubr.f32.gmra.mrb[0].mxu0 %v838
        %v916 = vpop.f32.mrb[0].mxu0
        %v917 = vadd.f32 %v848, %v916
        %v918 = vpop.f32.mrb[0].mxu0
        %919 = vdwg.mxu0
        %v920 = vxor.u32 %v917, 2147483648
        %v921 = vmul.f32 %v920, 1.442695
        %v922 = vpow.pop %v921
        %v923 = vadd.f32 %v922, 1.0
        %v924 = vrcp.pop %v923
        %v925 = vmul.f32 1.0, %v924
        %vm926 = vcmask 130048
        %927 = vst.msk [vmem:[%s244] sm:$0xff] %vm926, %v925
        %s928 = scalar_lea.vmem %s253, 8
        %v929 = vld [vmem:[%s928] sm:$0xff]
        %v930 = vld [vmem:[%s928 + $0x10] sm:$0xff]
        %v931 = vld [vmem:[%s928 + $0x20] sm:$0xff]
        %v932 = vld [vmem:[%s928 + $0x30] sm:$0xff]
        %v933 = vld [vmem:[%s1] sm:$0xff]
        %v934 = vld [vmem:[%s1 + $0x8] sm:$0xff]
        %v935 = vld [vmem:[%s1 + $0x10] sm:$0xff]
        %v936 = vld [vmem:[%s1 + $0x18] sm:$0xff]
        %v937 = vld [vmem:[%s1 + $0x20] sm:$0xff]
        %v938 = vld [vmem:[%s1 + $0x28] sm:$0xff]
        %v939 = vld [vmem:[%s1 + $0x30] sm:$0xff]
        %v940 = vld [vmem:[%s1 + $0x38] sm:$0xff]
        %v941 = vld [vmem:[%s1 + $0x40] sm:$0xff]
        %v942 = vld [vmem:[%s1 + $0x48] sm:$0xff]
        %v943 = vld [vmem:[%s1 + $0x50] sm:$0xff]
        %v944 = vld [vmem:[%s1 + $0x58] sm:$0xff]
        %v945 = vld [vmem:[%s1 + $0x60] sm:$0xff]
        %v946 = vld [vmem:[%s1 + $0x68] sm:$0xff]
        %v947 = vld [vmem:[%s1 + $0x70] sm:$0xff]
        %v948 = vld [vmem:[%s1 + $0x78] sm:$0xff]
        %v949 = vld [vmem:[%s1 + $0x80] sm:$0xff]
        %v950 = vld [vmem:[%s1 + $0x88] sm:$0xff]
        %v951 = vld [vmem:[%s1 + $0x90] sm:$0xff]
        %v952 = vld [vmem:[%s1 + $0x98] sm:$0xff]
        %v953 = vld [vmem:[%s1 + $0xa0] sm:$0xff]
        %v954 = vld [vmem:[%s1 + $0xa8] sm:$0xff]
        %v955 = vld [vmem:[%s1 + $0xb0] sm:$0xff]
        %v956 = vld [vmem:[%s1 + $0xb8] sm:$0xff]
        %v957 = vld [vmem:[%s1 + $0xc0] sm:$0xff]
        %v958 = vld [vmem:[%s1 + $0xc8] sm:$0xff]
        %v959 = vld [vmem:[%s1 + $0xd0] sm:$0xff]
        %v960 = vld [vmem:[%s1 + $0xd8] sm:$0xff]
        %v961 = vld [vmem:[%s1 + $0xe0] sm:$0xff]
        %v962 = vld [vmem:[%s1 + $0xe8] sm:$0xff]
        %v963 = vld [vmem:[%s1 + $0xf0] sm:$0xff]
        %v964 = vld [vmem:[%s1 + $0xf8] sm:$0xff]
        %v965 = vld [vmem:[%s2] sm:$0xff]
        %v966 = vld [vmem:[%s2 + $0x8] sm:$0xff]
        %v967 = vld [vmem:[%s2 + $0x10] sm:$0xff]
        %v968 = vld [vmem:[%s2 + $0x18] sm:$0xff]
        %v969 = vld [vmem:[%s2 + $0x20] sm:$0xff]
        %v970 = vld [vmem:[%s2 + $0x28] sm:$0xff]
        %v971 = vld [vmem:[%s2 + $0x30] sm:$0xff]
        %v972 = vld [vmem:[%s2 + $0x38] sm:$0xff]
        %v973 = vld [vmem:[%s2 + $0x40] sm:$0xff]
        %v974 = vld [vmem:[%s2 + $0x48] sm:$0xff]
        %v975 = vld [vmem:[%s2 + $0x50] sm:$0xff]
        %v976 = vld [vmem:[%s2 + $0x58] sm:$0xff]
        %v977 = vld [vmem:[%s2 + $0x60] sm:$0xff]
        %v978 = vld [vmem:[%s2 + $0x68] sm:$0xff]
        %v979 = vld [vmem:[%s2 + $0x70] sm:$0xff]
        %v980 = vld [vmem:[%s2 + $0x78] sm:$0xff]
        %v981 = vld [vmem:[%s2 + $0x80] sm:$0xff]
        %v982 = vld [vmem:[%s2 + $0x88] sm:$0xff]
        %v983 = vld [vmem:[%s2 + $0x90] sm:$0xff]
        %v984 = vld [vmem:[%s2 + $0x98] sm:$0xff]
        %v985 = vld [vmem:[%s2 + $0xa0] sm:$0xff]
        %v986 = vld [vmem:[%s2 + $0xa8] sm:$0xff]
        %v987 = vld [vmem:[%s2 + $0xb0] sm:$0xff]
        %v988 = vld [vmem:[%s2 + $0xb8] sm:$0xff]
        %v989 = vld [vmem:[%s2 + $0xc0] sm:$0xff]
        %v990 = vld [vmem:[%s2 + $0xc8] sm:$0xff]
        %v991 = vld [vmem:[%s2 + $0xd0] sm:$0xff]
        %v992 = vld [vmem:[%s2 + $0xd8] sm:$0xff]
        %v993 = vld [vmem:[%s2 + $0xe0] sm:$0xff]
        %v994 = vld [vmem:[%s2 + $0xe8] sm:$0xff]
        %v995 = vld [vmem:[%s2 + $0xf0] sm:$0xff]
        %v996 = vld [vmem:[%s2 + $0xf8] sm:$0xff]
        %998 = vset.pattern.permute.xlu0 0
        %999 = vperm.xlu0 %998, %v965
        %v1000 = vpop.permute.xlu0 %999
        %1003 = vset.pattern.permute.xlu0 0
        %1004 = vperm.xlu0 %1003, %v966
        %v1005 = vpop.permute.xlu0 %1004
        %1008 = vset.pattern.permute.xlu0 0
        %1009 = vperm.xlu0 %1008, %v967
        %v1010 = vpop.permute.xlu0 %1009
        %1013 = vset.pattern.permute.xlu0 0
        %1014 = vperm.xlu0 %1013, %v968
        %v1015 = vpop.permute.xlu0 %1014
        %1018 = vset.pattern.permute.xlu0 0
        %1019 = vperm.xlu0 %1018, %v969
        %v1020 = vpop.permute.xlu0 %1019
        %1023 = vset.pattern.permute.xlu0 0
        %1024 = vperm.xlu0 %1023, %v970
        %v1025 = vpop.permute.xlu0 %1024
        %1028 = vset.pattern.permute.xlu0 0
        %1029 = vperm.xlu0 %1028, %v971
        %v1030 = vpop.permute.xlu0 %1029
        %1033 = vset.pattern.permute.xlu0 0
        %1034 = vperm.xlu0 %1033, %v972
        %v1035 = vpop.permute.xlu0 %1034
        %1038 = vset.pattern.permute.xlu0 0
        %1039 = vperm.xlu0 %1038, %v973
        %v1040 = vpop.permute.xlu0 %1039
        %1043 = vset.pattern.permute.xlu0 0
        %1044 = vperm.xlu0 %1043, %v974
        %v1045 = vpop.permute.xlu0 %1044
        %1048 = vset.pattern.permute.xlu0 0
        %1049 = vperm.xlu0 %1048, %v975
        %v1050 = vpop.permute.xlu0 %1049
        %1053 = vset.pattern.permute.xlu0 0
        %1054 = vperm.xlu0 %1053, %v976
        %v1055 = vpop.permute.xlu0 %1054
        %1058 = vset.pattern.permute.xlu0 0
        %1059 = vperm.xlu0 %1058, %v977
        %v1060 = vpop.permute.xlu0 %1059
        %1063 = vset.pattern.permute.xlu0 0
        %1064 = vperm.xlu0 %1063, %v978
        %v1065 = vpop.permute.xlu0 %1064
        %1068 = vset.pattern.permute.xlu0 0
        %1069 = vperm.xlu0 %1068, %v979
        %v1070 = vpop.permute.xlu0 %1069
        %1073 = vset.pattern.permute.xlu0 0
        %1074 = vperm.xlu0 %1073, %v980
        %v1075 = vpop.permute.xlu0 %1074
        %1078 = vset.pattern.permute.xlu0 0
        %1079 = vperm.xlu0 %1078, %v981
        %v1080 = vpop.permute.xlu0 %1079
        %1083 = vset.pattern.permute.xlu0 0
        %1084 = vperm.xlu0 %1083, %v982
        %v1085 = vpop.permute.xlu0 %1084
        %1088 = vset.pattern.permute.xlu0 0
        %1089 = vperm.xlu0 %1088, %v983
        %v1090 = vpop.permute.xlu0 %1089
        %1093 = vset.pattern.permute.xlu0 0
        %1094 = vperm.xlu0 %1093, %v984
        %v1095 = vpop.permute.xlu0 %1094
        %1098 = vset.pattern.permute.xlu0 0
        %1099 = vperm.xlu0 %1098, %v985
        %v1100 = vpop.permute.xlu0 %1099
        %1103 = vset.pattern.permute.xlu0 0
        %1104 = vperm.xlu0 %1103, %v986
        %v1105 = vpop.permute.xlu0 %1104
        %1108 = vset.pattern.permute.xlu0 0
        %1109 = vperm.xlu0 %1108, %v987
        %v1110 = vpop.permute.xlu0 %1109
        %1113 = vset.pattern.permute.xlu0 0
        %1114 = vperm.xlu0 %1113, %v988
        %v1115 = vpop.permute.xlu0 %1114
        %1118 = vset.pattern.permute.xlu0 0
        %1119 = vperm.xlu0 %1118, %v989
        %v1120 = vpop.permute.xlu0 %1119
        %1123 = vset.pattern.permute.xlu0 0
        %1124 = vperm.xlu0 %1123, %v990
        %v1125 = vpop.permute.xlu0 %1124
        %1128 = vset.pattern.permute.xlu0 0
        %1129 = vperm.xlu0 %1128, %v991
        %v1130 = vpop.permute.xlu0 %1129
        %1133 = vset.pattern.permute.xlu0 0
        %1134 = vperm.xlu0 %1133, %v992
        %v1135 = vpop.permute.xlu0 %1134
        %1138 = vset.pattern.permute.xlu0 0
        %1139 = vperm.xlu0 %1138, %v993
        %v1140 = vpop.permute.xlu0 %1139
        %1143 = vset.pattern.permute.xlu0 0
        %1144 = vperm.xlu0 %1143, %v994
        %v1145 = vpop.permute.xlu0 %1144
        %1148 = vset.pattern.permute.xlu0 0
        %1149 = vperm.xlu0 %1148, %v995
        %v1150 = vpop.permute.xlu0 %1149
        %1153 = vset.pattern.permute.xlu0 0
        %1154 = vperm.xlu0 %1153, %v996
        %v1155 = vpop.permute.xlu0 %1154
        %v1158 = vsel %vm484, %v933, 0
        %v1161 = vsel %vm484, %v934, 0
        %v1164 = vsel %vm484, %v935, 0
        %v1167 = vsel %vm484, %v936, 0
        %v1170 = vsel %vm484, %v937, 0
        %v1173 = vsel %vm484, %v938, 0
        %v1176 = vsel %vm484, %v939, 0
        %v1179 = vsel %vm484, %v940, 0
        %v1182 = vsel %vm484, %v941, 0
        %v1185 = vsel %vm484, %v942, 0
        %v1188 = vsel %vm484, %v943, 0
        %v1191 = vsel %vm484, %v944, 0
        %v1194 = vsel %vm484, %v945, 0
        %v1197 = vsel %vm484, %v946, 0
        %v1200 = vsel %vm484, %v947, 0
        %v1203 = vsel %vm484, %v948, 0
        %v1206 = vsel %vm484, %v949, 0
        %v1209 = vsel %vm484, %v950, 0
        %v1212 = vsel %vm484, %v951, 0
        %v1215 = vsel %vm484, %v952, 0
        %v1218 = vsel %vm484, %v953, 0
        %v1221 = vsel %vm484, %v954, 0
        %v1224 = vsel %vm484, %v955, 0
        %v1227 = vsel %vm484, %v956, 0
        %v1230 = vsel %vm484, %v957, 0
        %v1233 = vsel %vm484, %v958, 0
        %v1236 = vsel %vm484, %v959, 0
        %v1239 = vsel %vm484, %v960, 0
        %v1242 = vsel %vm484, %v961, 0
        %v1245 = vsel %vm484, %v962, 0
        %v1248 = vsel %vm484, %v963, 0
        %v1251 = vsel %vm484, %v964, 0
        %1253 = vmatprep.subr.mxu0 0.0
        %1254 = vmatpush1.msra.mxu0 %v929
        %1255 = vmatprep.subr.mxu0 0.0
        %1256 = vmatpush1.msra.mxu0 %v930
        %1257 = vmatprep.subr.mxu0 0.0
        %1258 = vmatpush1.msra.mxu0 %v931
        %1259 = vmatprep.subr.mxu0 0.0
        %1260 = vmatpush1.msra.mxu0 %v932
        %1261 = vmatprep.subr.mxu0 0.0
        %1262 = vmatpush1.msra.mxu0 0.0
        %1263 = vmatprep.subr.mxu0 0.0
        %1264 = vmatpush1.msra.mxu0 0.0
        %1265 = vmatprep.subr.mxu0 0.0
        %1266 = vmatpush1.msra.mxu0 0.0
        %1267 = vmatprep.subr.mxu0 0.0
        %1268 = vmatpush1.msra.mxu0 0.0
        %1269 = vmatprep.subr.mxu0 0.0
        %1270 = vmatpush1.msra.mxu0 0.0
        %1271 = vmatprep.subr.mxu0 0.0
        %1272 = vmatpush1.msra.mxu0 0.0
        %1273 = vmatprep.subr.mxu0 0.0
        %1274 = vmatpush1.msra.mxu0 0.0
        %1275 = vmatprep.subr.mxu0 0.0
        %1276 = vmatpush1.msra.mxu0 0.0
        %1277 = vmatprep.subr.mxu0 0.0
        %1278 = vmatpush1.msra.mxu0 0.0
        %1279 = vmatprep.subr.mxu0 0.0
        %1280 = vmatpush1.msra.mxu0 0.0
        %1281 = vmatprep.subr.mxu0 0.0
        %1282 = vmatpush1.msra.mxu0 0.0
        %1283 = vmatprep.subr.mxu0 0.0
        %1284 = vmatpush1.msra.mxu0 0.0
        %1285 = vmatprep.subr.mxu0 0.0
        %1286 = vmatpush1.msra.mxu0 0.0
        %1287 = vmatprep.subr.mxu0 0.0
        %1288 = vmatpush1.msra.mxu0 0.0
        %1289 = vmatprep.subr.mxu0 0.0
        %1290 = vmatpush1.msra.mxu0 0.0
        %1291 = vmatprep.subr.mxu0 0.0
        %1292 = vmatpush1.msra.mxu0 0.0
        %1293 = vmatprep.subr.mxu0 0.0
        %1294 = vmatpush1.msra.mxu0 0.0
        %1295 = vmatprep.subr.mxu0 0.0
        %1296 = vmatpush1.msra.mxu0 0.0
        %1297 = vmatprep.subr.mxu0 0.0
        %1298 = vmatpush1.msra.mxu0 0.0
        %1299 = vmatprep.subr.mxu0 0.0
        %1300 = vmatpush1.msra.mxu0 0.0
        %1301 = vmatprep.subr.mxu0 0.0
        %1302 = vmatpush1.msra.mxu0 0.0
        %1303 = vmatprep.subr.mxu0 0.0
        %1304 = vmatpush1.msra.mxu0 0.0
        %1305 = vmatprep.subr.mxu0 0.0
        %1306 = vmatpush1.msra.mxu0 0.0
        %1307 = vmatprep.subr.mxu0 0.0
        %1308 = vmatpush1.msra.mxu0 0.0
        %1309 = vmatprep.subr.mxu0 0.0
        %1310 = vmatpush1.msra.mxu0 0.0
        %1311 = vmatprep.subr.mxu0 0.0
        %1312 = vmatpush1.msra.mxu0 0.0
        %1313 = vmatprep.subr.mxu0 0.0
        %1314 = vmatpush1.msra.mxu0 0.0
        %1315 = vmatprep.subr.mxu0 0.0
        %1316 = vmatpush1.msra.mxu0 0.0
        %1317 = vmatprep.mubr.f32.mxu0 0.0
        %1318 = vmatmul.mubr.f32.gmra.mrb[0].mxu0 %v1158
        %v1319 = vpop.f32.mrb[0].mxu0
        %v1320 = vadd.f32 %v1000, %v1319
        %v1321 = vpop.f32.mrb[0].mxu0
        %1322 = vmatprep.mubr.f32.mxu0 0.0
        %1323 = vmatmul.mubr.f32.gmra.mrb[0].mxu0 %v1161
        %v1324 = vpop.f32.mrb[0].mxu0
        %v1325 = vadd.f32 %v1005, %v1324
        %v1326 = vpop.f32.mrb[0].mxu0
        %1327 = vmatprep.mubr.f32.mxu0 0.0
        %1328 = vmatmul.mubr.f32.gmra.mrb[0].mxu0 %v1164
        %v1329 = vpop.f32.mrb[0].mxu0
        %v1330 = vadd.f32 %v1010, %v1329
        %v1331 = vpop.f32.mrb[0].mxu0
        %1332 = vmatprep.mubr.f32.mxu0 0.0
        %1333 = vmatmul.mubr.f32.gmra.mrb[0].mxu0 %v1167
        %v1334 = vpop.f32.mrb[0].mxu0
        %v1335 = vadd.f32 %v1015, %v1334
        %v1336 = vpop.f32.mrb[0].mxu0
        %1337 = vmatprep.mubr.f32.mxu0 0.0
        %1338 = vmatmul.mubr.f32.gmra.mrb[0].mxu0 %v1170
        %v1339 = vpop.f32.mrb[0].mxu0
        %v1340 = vadd.f32 %v1020, %v1339
        %v1341 = vpop.f32.mrb[0].mxu0
        %1342 = vmatprep.mubr.f32.mxu0 0.0
        %1343 = vmatmul.mubr.f32.gmra.mrb[0].mxu0 %v1173
        %v1344 = vpop.f32.mrb[0].mxu0
        %v1345 = vadd.f32 %v1025, %v1344
        %v1346 = vpop.f32.mrb[0].mxu0
        %1347 = vmatprep.mubr.f32.mxu0 0.0
        %1348 = vmatmul.mubr.f32.gmra.mrb[0].mxu0 %v1176
        %v1349 = vpop.f32.mrb[0].mxu0
        %v1350 = vadd.f32 %v1030, %v1349
        %v1351 = vpop.f32.mrb[0].mxu0
        %1352 = vmatprep.mubr.f32.mxu0 0.0
        %1353 = vmatmul.mubr.f32.gmra.mrb[0].mxu0 %v1179
        %v1354 = vpop.f32.mrb[0].mxu0
        %v1355 = vadd.f32 %v1035, %v1354
        %v1356 = vpop.f32.mrb[0].mxu0
        %1357 = vmatprep.mubr.f32.mxu0 0.0
        %1358 = vmatmul.mubr.f32.gmra.mrb[0].mxu0 %v1182
        %v1359 = vpop.f32.mrb[0].mxu0
        %v1360 = vadd.f32 %v1040, %v1359
        %v1361 = vpop.f32.mrb[0].mxu0
        %1362 = vmatprep.mubr.f32.mxu0 0.0
        %1363 = vmatmul.mubr.f32.gmra.mrb[0].mxu0 %v1185
        %v1364 = vpop.f32.mrb[0].mxu0
        %v1365 = vadd.f32 %v1045, %v1364
        %v1366 = vpop.f32.mrb[0].mxu0
        %1367 = vmatprep.mubr.f32.mxu0 0.0
        %1368 = vmatmul.mubr.f32.gmra.mrb[0].mxu0 %v1188
        %v1369 = vpop.f32.mrb[0].mxu0
        %v1370 = vadd.f32 %v1050, %v1369
        %v1371 = vpop.f32.mrb[0].mxu0
        %1372 = vmatprep.mubr.f32.mxu0 0.0
        %1373 = vmatmul.mubr.f32.gmra.mrb[0].mxu0 %v1191
        %v1374 = vpop.f32.mrb[0].mxu0
        %v1375 = vadd.f32 %v1055, %v1374
        %v1376 = vpop.f32.mrb[0].mxu0
        %1377 = vmatprep.mubr.f32.mxu0 0.0
        %1378 = vmatmul.mubr.f32.gmra.mrb[0].mxu0 %v1194
        %v1379 = vpop.f32.mrb[0].mxu0
        %v1380 = vadd.f32 %v1060, %v1379
        %v1381 = vpop.f32.mrb[0].mxu0
        %1382 = vmatprep.mubr.f32.mxu0 0.0
        %1383 = vmatmul.mubr.f32.gmra.mrb[0].mxu0 %v1197
        %v1384 = vpop.f32.mrb[0].mxu0
        %v1385 = vadd.f32 %v1065, %v1384
        %v1386 = vpop.f32.mrb[0].mxu0
        %1387 = vmatprep.mubr.f32.mxu0 0.0
        %1388 = vmatmul.mubr.f32.gmra.mrb[0].mxu0 %v1200
        %v1389 = vpop.f32.mrb[0].mxu0
        %v1390 = vadd.f32 %v1070, %v1389
        %v1391 = vpop.f32.mrb[0].mxu0
        %1392 = vmatprep.mubr.f32.mxu0 0.0
        %1393 = vmatmul.mubr.f32.gmra.mrb[0].mxu0 %v1203
        %v1394 = vpop.f32.mrb[0].mxu0
        %v1395 = vadd.f32 %v1075, %v1394
        %v1396 = vpop.f32.mrb[0].mxu0
        %1397 = vmatprep.mubr.f32.mxu0 0.0
        %1398 = vmatmul.mubr.f32.gmra.mrb[0].mxu0 %v1206
        %v1399 = vpop.f32.mrb[0].mxu0
        %v1400 = vadd.f32 %v1080, %v1399
        %v1401 = vpop.f32.mrb[0].mxu0
        %1402 = vmatprep.mubr.f32.mxu0 0.0
        %1403 = vmatmul.mubr.f32.gmra.mrb[0].mxu0 %v1209
        %v1404 = vpop.f32.mrb[0].mxu0
        %v1405 = vadd.f32 %v1085, %v1404
        %v1406 = vpop.f32.mrb[0].mxu0
        %1407 = vmatprep.mubr.f32.mxu0 0.0
        %1408 = vmatmul.mubr.f32.gmra.mrb[0].mxu0 %v1212
        %v1409 = vpop.f32.mrb[0].mxu0
        %v1410 = vadd.f32 %v1090, %v1409
        %v1411 = vpop.f32.mrb[0].mxu0
        %1412 = vmatprep.mubr.f32.mxu0 0.0
        %1413 = vmatmul.mubr.f32.gmra.mrb[0].mxu0 %v1215
        %v1414 = vpop.f32.mrb[0].mxu0
        %v1415 = vadd.f32 %v1095, %v1414
        %v1416 = vpop.f32.mrb[0].mxu0
        %1417 = vmatprep.mubr.f32.mxu0 0.0
        %1418 = vmatmul.mubr.f32.gmra.mrb[0].mxu0 %v1218
        %v1419 = vpop.f32.mrb[0].mxu0
        %v1420 = vadd.f32 %v1100, %v1419
        %v1421 = vpop.f32.mrb[0].mxu0
        %1422 = vmatprep.mubr.f32.mxu0 0.0
        %1423 = vmatmul.mubr.f32.gmra.mrb[0].mxu0 %v1221
        %v1424 = vpop.f32.mrb[0].mxu0
        %v1425 = vadd.f32 %v1105, %v1424
        %v1426 = vpop.f32.mrb[0].mxu0
        %1427 = vmatprep.mubr.f32.mxu0 0.0
        %1428 = vmatmul.mubr.f32.gmra.mrb[0].mxu0 %v1224
        %v1429 = vpop.f32.mrb[0].mxu0
        %v1430 = vadd.f32 %v1110, %v1429
        %v1431 = vpop.f32.mrb[0].mxu0
        %1432 = vmatprep.mubr.f32.mxu0 0.0
        %1433 = vmatmul.mubr.f32.gmra.mrb[0].mxu0 %v1227
        %v1434 = vpop.f32.mrb[0].mxu0
        %v1435 = vadd.f32 %v1115, %v1434
        %v1436 = vpop.f32.mrb[0].mxu0
        %1437 = vmatprep.mubr.f32.mxu0 0.0
        %1438 = vmatmul.mubr.f32.gmra.mrb[0].mxu0 %v1230
        %v1439 = vpop.f32.mrb[0].mxu0
        %v1440 = vadd.f32 %v1120, %v1439
        %v1441 = vpop.f32.mrb[0].mxu0
        %1442 = vmatprep.mubr.f32.mxu0 0.0
        %1443 = vmatmul.mubr.f32.gmra.mrb[0].mxu0 %v1233
        %v1444 = vpop.f32.mrb[0].mxu0
        %v1445 = vadd.f32 %v1125, %v1444
        %v1446 = vpop.f32.mrb[0].mxu0
        %1447 = vmatprep.mubr.f32.mxu0 0.0
        %1448 = vmatmul.mubr.f32.gmra.mrb[0].mxu0 %v1236
        %v1449 = vpop.f32.mrb[0].mxu0
        %v1450 = vadd.f32 %v1130, %v1449
        %v1451 = vpop.f32.mrb[0].mxu0
        %1452 = vmatprep.mubr.f32.mxu0 0.0
        %1453 = vmatmul.mubr.f32.gmra.mrb[0].mxu0 %v1239
        %v1454 = vpop.f32.mrb[0].mxu0
        %v1455 = vadd.f32 %v1135, %v1454
        %v1456 = vpop.f32.mrb[0].mxu0
        %1457 = vmatprep.mubr.f32.mxu0 0.0
        %1458 = vmatmul.mubr.f32.gmra.mrb[0].mxu0 %v1242
        %v1459 = vpop.f32.mrb[0].mxu0
        %v1460 = vadd.f32 %v1140, %v1459
        %v1461 = vpop.f32.mrb[0].mxu0
        %1462 = vmatprep.mubr.f32.mxu0 0.0
        %1463 = vmatmul.mubr.f32.gmra.mrb[0].mxu0 %v1245
        %v1464 = vpop.f32.mrb[0].mxu0
        %v1465 = vadd.f32 %v1145, %v1464
        %v1466 = vpop.f32.mrb[0].mxu0
        %1467 = vmatprep.mubr.f32.mxu0 0.0
        %1468 = vmatmul.mubr.f32.gmra.mrb[0].mxu0 %v1248
        %v1469 = vpop.f32.mrb[0].mxu0
        %v1470 = vadd.f32 %v1150, %v1469
        %v1471 = vpop.f32.mrb[0].mxu0
        %1472 = vmatprep.mubr.f32.mxu0 0.0
        %1473 = vmatmul.mubr.f32.gmra.mrb[0].mxu0 %v1251
        %v1474 = vpop.f32.mrb[0].mxu0
        %v1475 = vadd.f32 %v1155, %v1474
        %v1476 = vpop.f32.mrb[0].mxu0
        %1477 = vdwg.mxu0
        %v1478 = vmax.f32 %v1320, 0.0
        %v1479 = vmax.f32 %v1325, 0.0
        %v1480 = vmax.f32 %v1330, 0.0
        %v1481 = vmax.f32 %v1335, 0.0
        %v1482 = vmax.f32 %v1340, 0.0
        %v1483 = vmax.f32 %v1345, 0.0
        %v1484 = vmax.f32 %v1350, 0.0
        %v1485 = vmax.f32 %v1355, 0.0
        %v1486 = vmax.f32 %v1360, 0.0
        %v1487 = vmax.f32 %v1365, 0.0
        %v1488 = vmax.f32 %v1370, 0.0
        %v1489 = vmax.f32 %v1375, 0.0
        %v1490 = vmax.f32 %v1380, 0.0
        %v1491 = vmax.f32 %v1385, 0.0
        %v1492 = vmax.f32 %v1390, 0.0
        %v1493 = vmax.f32 %v1395, 0.0
        %v1494 = vmax.f32 %v1400, 0.0
        %v1495 = vmax.f32 %v1405, 0.0
        %v1496 = vmax.f32 %v1410, 0.0
        %v1497 = vmax.f32 %v1415, 0.0
        %v1498 = vmax.f32 %v1420, 0.0
        %v1499 = vmax.f32 %v1425, 0.0
        %v1500 = vmax.f32 %v1430, 0.0
        %v1501 = vmax.f32 %v1435, 0.0
        %v1502 = vmax.f32 %v1440, 0.0
        %v1503 = vmax.f32 %v1445, 0.0
        %v1504 = vmax.f32 %v1450, 0.0
        %v1505 = vmax.f32 %v1455, 0.0
        %v1506 = vmax.f32 %v1460, 0.0
        %v1507 = vmax.f32 %v1465, 0.0
        %v1508 = vmax.f32 %v1470, 0.0
        %v1509 = vmax.f32 %v1475, 0.0
        %v1510 = vld [vmem:[%s3] sm:$0xff]
        %v1511 = vld [vmem:[%s3 + $0x8] sm:$0xff]
        %v1512 = vld [vmem:[#allocation2] sm:$0x1]
        %v1514 = vlaneseq
        %v1515 = vshrl.u32 %v1514, 7
        %v1516 = vsub.s32 0, %v1515
        %v1517 = vrot.slane %v1512, %v1516
        %1518 = vset.pattern.permute.xlu0 0
        %1519 = vperm.xlu0 %1518, %v1517
        %v1520 = vpop.permute.xlu0 %1519
        %1522 = vmatprep.subr.mxu0 0.0
        %1523 = vmatpush1.msra.mxu0 %v1478
        %1524 = vmatprep.subr.mxu0 0.0
        %1525 = vmatpush1.msra.mxu0 %v1479
        %1526 = vmatprep.subr.mxu0 0.0
        %1527 = vmatpush1.msra.mxu0 %v1480
        %1528 = vmatprep.subr.mxu0 0.0
        %1529 = vmatpush1.msra.mxu0 %v1481
        %1530 = vmatprep.subr.mxu0 0.0
        %1531 = vmatpush1.msra.mxu0 %v1482
        %1532 = vmatprep.subr.mxu0 0.0
        %1533 = vmatpush1.msra.mxu0 %v1483
        %1534 = vmatprep.subr.mxu0 0.0
        %1535 = vmatpush1.msra.mxu0 %v1484
        %1536 = vmatprep.subr.mxu0 0.0
        %1537 = vmatpush1.msra.mxu0 %v1485
        %1538 = vmatprep.subr.mxu0 0.0
        %1539 = vmatpush1.msra.mxu0 %v1486
        %1540 = vmatprep.subr.mxu0 0.0
        %1541 = vmatpush1.msra.mxu0 %v1487
        %1542 = vmatprep.subr.mxu0 0.0
        %1543 = vmatpush1.msra.mxu0 %v1488
        %1544 = vmatprep.subr.mxu0 0.0
        %1545 = vmatpush1.msra.mxu0 %v1489
        %1546 = vmatprep.subr.mxu0 0.0
        %1547 = vmatpush1.msra.mxu0 %v1490
        %1548 = vmatprep.subr.mxu0 0.0
        %1549 = vmatpush1.msra.mxu0 %v1491
        %1550 = vmatprep.subr.mxu0 0.0
        %1551 = vmatpush1.msra.mxu0 %v1492
        %1552 = vmatprep.subr.mxu0 0.0
        %1553 = vmatpush1.msra.mxu0 %v1493
        %1554 = vmatprep.subr.mxu0 0.0
        %1555 = vmatpush1.msra.mxu0 %v1494
        %1556 = vmatprep.subr.mxu0 0.0
        %1557 = vmatpush1.msra.mxu0 %v1495
        %1558 = vmatprep.subr.mxu0 0.0
        %1559 = vmatpush1.msra.mxu0 %v1496
        %1560 = vmatprep.subr.mxu0 0.0
        %1561 = vmatpush1.msra.mxu0 %v1497
        %1562 = vmatprep.subr.mxu0 0.0
        %1563 = vmatpush1.msra.mxu0 %v1498
        %1564 = vmatprep.subr.mxu0 0.0
        %1565 = vmatpush1.msra.mxu0 %v1499
        %1566 = vmatprep.subr.mxu0 0.0
        %1567 = vmatpush1.msra.mxu0 %v1500
        %1568 = vmatprep.subr.mxu0 0.0
        %1569 = vmatpush1.msra.mxu0 %v1501
        %1570 = vmatprep.subr.mxu0 0.0
        %1571 = vmatpush1.msra.mxu0 %v1502
        %1572 = vmatprep.subr.mxu0 0.0
        %1573 = vmatpush1.msra.mxu0 %v1503
        %1574 = vmatprep.subr.mxu0 0.0
        %1575 = vmatpush1.msra.mxu0 %v1504
        %1576 = vmatprep.subr.mxu0 0.0
        %1577 = vmatpush1.msra.mxu0 %v1505
        %1578 = vmatprep.subr.mxu0 0.0
        %1579 = vmatpush1.msra.mxu0 %v1506
        %1580 = vmatprep.subr.mxu0 0.0
        %1581 = vmatpush1.msra.mxu0 %v1507
        %1582 = vmatprep.subr.mxu0 0.0
        %1583 = vmatpush1.msra.mxu0 %v1508
        %1584 = vmatprep.subr.mxu0 0.0
        %1585 = vmatpush1.msra.mxu0 %v1509
        %1586 = vmatprep.mubr.f32.mxu0 %v1511
        %1587 = vmatmul.mubr.f32.gmra.mrb[0].mxu0 %v1510
        %v1588 = vpop.f32.mrb[0].mxu0
        %v1589 = vadd.f32 %v1520, %v1588
        %v1590 = vpop.f32.mrb[0].mxu0
        %1591 = vdwg.mxu0
        %v1592 = vxor.u32 %v1589, 2147483648
        %v1593 = vmul.f32 %v1592, 1.442695
        %v1594 = vpow.pop %v1593
        %v1595 = vadd.f32 %v1594, 1.0
        %v1596 = vrcp.pop %v1595
        %v1597 = vmul.f32 1.0, %v1596
        %s1598 = scalar_lea.vmem %s244, 8 [#allocation3]
        %1599 = vst.msk [vmem:[%s1598] sm:$0xff] %vm926, %v1597
        %s1600 = sand.u32 %s155, 1
        %s1601 = scalar_lea.sflag [#allocation4], %s1600
        %s1602 = sand.u32 %s155, 1
        %s1603 = smul.addr %s1602, 16
        %s1604 = scalar_lea.vmem [#allocation3], %s1603
        // Predicated region
        $region41: #{normalized_color_importance.1} parent=39 // pred_check
          %p1605 = pneg %p165
        $region42: #{normalized_color_importance.1} parent=39 // pred_check_branch
          %1607 = sbr.rel (%p1605) target = $region44
        $region43: #{normalized_color_importance.1} parent=39 // pred_region
          %s1608 = smul.u32 2, %s26
          %s1610 = ssub.s32 256, 256
          %1611 = vsyncadd %s1601, %s1610
          %s1612 = smul.addr %s25, 2
          %s1613 = sadd.s32 %s1608, %s1612
          %s1614 = smul.addr %s1613, 128
          %s1615 = scalar_lea.hbm %s5, %s1614
          %s1616 = sshll.u32 %s1604, 4
          %s1617 = int_to_ptr.vmem [resolvable:$true] %s1616
          %1622 = dma.vmem_to_hbm [thread:$0]  %s1617, 256, %s1615, %s1601, 128, 128, 8
        $region44: #{normalized_color_importance.1} parent=39 // pred_fallthru
          _
      $region40: #{normalized_color_importance.1} parent=5 // pred_fallthru
        _
      %p1623 = scmp.le.s32.totalorder 2, %s16
      // Predicated region
      $region45: #{normalized_color_importance.1} parent=5 // pred_check
        %p1624 = pneg %p1623
      $region46: #{normalized_color_importance.1} parent=5 // pred_check_branch
        %1626 = sbr.rel (%p1624) target = $region48
      $region47: #{normalized_color_importance.1} parent=5 // pred_region
        %s1627 = ssub.s32 %s16, 2
        // Predicated region
        $region49: #{normalized_color_importance.1} parent=47 // pred_check
          %p1628 = pneg %p171
        $region50: #{normalized_color_importance.1} parent=47 // pred_check_branch
          %1630 = sbr.rel (%p1628) target = $region52
        $region51: #{normalized_color_importance.1} parent=47 // pred_region
          %s1631 = sand.u32 %s156, 1
          %s1632 = scalar_lea.sflag [#allocation4], %s1631
          %s1633 = sand.u32 %s156, 1
          %s1634 = smul.addr %s1633, 16
          %s1635 = scalar_lea.vmem [#allocation3], %s1634
          %1636 = dma.done %s1632, 256
        $region52: #{normalized_color_importance.1} parent=47 // pred_fallthru
          _
      $region48: #{normalized_color_importance.1} parent=5 // pred_fallthru
        _
    $region6: #{normalized_color_importance.1} parent=1 // loop_footer
      %s20 = sadd.s32 1, %s16
    $region7: #{normalized_color_importance.1} parent=1 // loop_footer_branch
      %15 = sbr.rel target = $region3
    $region8: #{normalized_color_importance.1} parent=1 // loop_exit
      _
    %1637 = vsyncpa [#allocation4], 1
    %s1638 = scalar_lea.sflag [#allocation4], 1
    %1639 = vsyncpa %s1638, 1

</llo_original>
